<compile_context>
chip_gen: v7x
topology: tpu7x:2x2x1
jax: 0.10.0
libtpu: 0.0.40
codegen_flags: <defaults>
</compile_context>

<pallas_src>
import functools

import jax
import jax.numpy as jnp
from jax.experimental import pallas as pl
from jax.experimental.pallas import tpu as pltpu


_COMPILER_PARAMS = pltpu.CompilerParams(
    dimension_semantics=("parallel",),          # batch elements are independent
    vmem_limit_bytes=64 * 1024 * 1024,          # <= physical VMEM on all gens
)


# ---------------------------------------------------------------------------
# In-kernel helpers
# ---------------------------------------------------------------------------

def _gn_silu_2d(x2, gamma, beta, num_groups, eps):
    """GroupNorm(num_groups) + SiLU on a (H*W, C) f32 tile (one batch element).

    Group statistics via channel->group one-hot matmuls (lane friendly, no
    channel-splitting reshapes).
    """
    hw, c = x2.shape
    cg = c // num_groups

    ch = jax.lax.broadcasted_iota(jnp.int32, (c, num_groups), 0)
    gr = jax.lax.broadcasted_iota(jnp.int32, (c, num_groups), 1)
    m = (ch // cg == gr).astype(jnp.float32)                       # (C, G)
    ch_t = jax.lax.broadcasted_iota(jnp.int32, (num_groups, c), 1)
    gr_t = jax.lax.broadcasted_iota(jnp.int32, (num_groups, c), 0)
    m_t = (ch_t // cg == gr_t).astype(jnp.float32)                 # (G, C)

    s = jnp.sum(x2, axis=0, keepdims=True)                         # (1, C)
    ss = jnp.sum(x2 * x2, axis=0, keepdims=True)                   # (1, C)
    cnt = float(hw * cg)

    gmean = jnp.dot(s, m, preferred_element_type=jnp.float32) / cnt
    gmsq = jnp.dot(ss, m, preferred_element_type=jnp.float32) / cnt
    gvar = jnp.maximum(gmsq - gmean * gmean, 0.0)                  # clamp >= 0

    mean_c = jnp.dot(gmean, m_t, preferred_element_type=jnp.float32)   # (1, C)
    var_c = jnp.dot(gvar, m_t, preferred_element_type=jnp.float32)     # (1, C)

    y = (x2 - mean_c) * jax.lax.rsqrt(var_c + eps)
    y = y * gamma + beta
    return y * jax.nn.sigmoid(y)


def _conv_from_scratch(pad_ref, x_hwc, w_flat, bias, kh, kw, stride, pad, ho, wo):
    """Conv via VMEM zero-padding + a single im2col matmul (K = kh*kw*Cin).

    pad_ref : VMEM scratch ((H-eff)+2*pad, (W-eff)+2*pad, Cin) f32
    x_hwc   : (H, W, Cin) f32 value
    w_flat  : (kh*kw*Cin, Cout) f32
    bias    : (1, Cout) f32
    returns : (ho*wo, Cout) f32
    """
    h, w, c = x_hwc.shape
    pad_ref[...] = jnp.zeros_like(pad_ref)          # zero border (VMEM only)
    pad_ref[pad:pad + h, pad:pad + w, :] = x_hwc    # write interior
    xp = pad_ref[...]

    cols = []
    for dy in range(kh):
        for dx in range(kw):
            patch = jax.lax.slice(
                xp,
                (dy, dx, 0),
                (dy + (ho - 1) * stride + 1, dx + (wo - 1) * stride + 1, c),
                (stride, stride, 1))
            cols.append(patch.reshape(ho * wo, c))
    im2col = cols[0] if len(cols) == 1 else jnp.concatenate(cols, axis=1)
    return jnp.dot(im2col, w_flat, preferred_element_type=jnp.float32) + bias


# ---------------------------------------------------------------------------
# Pallas kernels
# ---------------------------------------------------------------------------

def _gn_conv_kernel(*refs, kh, kw, stride, pad, apply_gn, num_groups, eps, n_x):
    """[optional in-VMEM channel concat] -> [optional GN+SiLU] -> conv."""
    x_refs = refs[:n_x]
    gamma_ref, beta_ref, w_ref, b_ref, o_ref, pad_ref = refs[n_x:]

    parts = [r[0].astype(jnp.float32) for r in x_refs]
    x = parts[0] if n_x == 1 else jnp.concatenate(parts, axis=-1)
    h, w, c = x.shape

    if apply_gn:
        x2 = _gn_silu_2d(x.reshape(h * w, c),
                         gamma_ref[...].astype(jnp.float32),
                         beta_ref[...].astype(jnp.float32),
                         num_groups, eps)
        x = x2.reshape(h, w, c)

    ho, wo, cout = o_ref.shape[1], o_ref.shape[2], o_ref.shape[3]
    acc = _conv_from_scratch(pad_ref, x,
                             w_ref[...].astype(jnp.float32),
                             b_ref[...].astype(jnp.float32),
                             kh, kw, stride, pad, ho, wo)
    o_ref[0] = acc.reshape(ho, wo, cout).astype(o_ref.dtype)


def _gn_conv_res_kernel(*refs, num_groups, eps, has_skip, n_res):
    """GN+SiLU -> conv3x3 -> (+ residual, via optional fused 1x1 skip conv)."""
    h_ref, gamma_ref, beta_ref, w_ref, b_ref = refs[:5]
    res_refs = refs[5:5 + n_res]
    idx = 5 + n_res
    if has_skip:
        ws_ref, bs_ref = refs[idx], refs[idx + 1]
        idx += 2
    o_ref, pad_ref = refs[idx], refs[idx + 1]

    hh = h_ref[0].astype(jnp.float32)
    hgt, wdt, c = hh.shape
    y2 = _gn_silu_2d(hh.reshape(hgt * wdt, c),
                     gamma_ref[...].astype(jnp.float32),
                     beta_ref[...].astype(jnp.float32),
                     num_groups, eps)

    cout = o_ref.shape[3]
    acc = _conv_from_scratch(pad_ref, y2.reshape(hgt, wdt, c),
                             w_ref[...].astype(jnp.float32),
                             b_ref[...].astype(jnp.float32),
                             3, 3, 1, 1, hgt, wdt)

    # Residual path (concat in VMEM when the block input was a skip-concat).
    rparts = [r[0].astype(jnp.float32) for r in res_refs]
    res = rparts[0] if n_res == 1 else jnp.concatenate(rparts, axis=-1)
    r2 = res.reshape(hgt * wdt, res.shape[-1])
    if has_skip:
        r2 = jnp.dot(r2, ws_ref[...].astype(jnp.float32),
                     preferred_element_type=jnp.float32)
        r2 = r2 + bs_ref[...].astype(jnp.float32)

    o_ref[0] = (acc + r2).reshape(hgt, wdt, cout).astype(o_ref.dtype)


# ---------------------------------------------------------------------------
# Pallas-backed ops (wrappers)
# ---------------------------------------------------------------------------

def gn_conv(x_parts, gamma, beta, w, b, *, stride=1, pad=1, apply_gn=True,
            num_groups=32, eps=1e-5):
    """Fused [concat ->] [GN+SiLU ->] conv on NHWC inputs (grid over batch)."""
    n, h, wdt = x_parts[0].shape[0], x_parts[0].shape[1], x_parts[0].shape[2]
    cs = [p.shape[3] for p in x_parts]
    cin = sum(cs)
    kh, kw, _, cout = w.shape
    ho = (h + 2 * pad - kh) // stride + 1
    wo = (wdt + 2 * pad - kw) // stride + 1

    w2 = w.reshape(kh * kw * cin, cout)   # im2col weight layout (dy, dx, cin)

    in_specs = [pl.BlockSpec((1, h, wdt, c), lambda i: (i, 0, 0, 0)) for c in cs]
    in_specs += [
        pl.BlockSpec((1, cin), lambda i: (0, 0)),
        pl.BlockSpec((1, cin), lambda i: (0, 0)),
        pl.BlockSpec((kh * kw * cin, cout), lambda i: (0, 0)),
        pl.BlockSpec((1, cout), lambda i: (0, 0)),
    ]

    kern = functools.partial(
        _gn_conv_kernel, kh=kh, kw=kw, stride=stride, pad=pad,
        apply_gn=apply_gn, num_groups=num_groups, eps=eps, n_x=len(x_parts))

    return pl.pallas_call(
        kern,
        out_shape=jax.ShapeDtypeStruct((n, ho, wo, cout), x_parts[0].dtype),
        grid=(n,),
        in_specs=in_specs,
        out_specs=pl.BlockSpec((1, ho, wo, cout), lambda i: (i, 0, 0, 0)),
        scratch_shapes=[pltpu.VMEM((h + 2 * pad, wdt + 2 * pad, cin), jnp.float32)],
        compiler_params=_COMPILER_PARAMS,
    )(*x_parts, gamma.reshape(1, cin), beta.reshape(1, cin), w2,
      b.reshape(1, cout))


def gn_conv_res(h, gamma, beta, w, b, res_parts, skip_w=None, skip_b=None,
                *, num_groups=32, eps=1e-5):
    """Fused GN+SiLU -> conv3x3 -> + residual (optional fused 1x1 skip conv)."""
    n, hgt, wdt, c = h.shape
    cout = w.shape[3]
    w2 = w.reshape(9 * c, cout)
    rcs = [p.shape[3] for p in res_parts]
    has_skip = skip_w is not None

    in_specs = [
        pl.BlockSpec((1, hgt, wdt, c), lambda i: (i, 0, 0, 0)),
        pl.BlockSpec((1, c), lambda i: (0, 0)),
        pl.BlockSpec((1, c), lambda i: (0, 0)),
        pl.BlockSpec((9 * c, cout), lambda i: (0, 0)),
        pl.BlockSpec((1, cout), lambda i: (0, 0)),
    ]
    args = [h, gamma.reshape(1, c), beta.reshape(1, c), w2, b.reshape(1, cout)]

    for rc, p in zip(rcs, res_parts):
        in_specs.append(pl.BlockSpec((1, hgt, wdt, rc), lambda i: (i, 0, 0, 0)))
        args.append(p)

    if has_skip:
        cin_r = sum(rcs)
        in_specs += [pl.BlockSpec((cin_r, cout), lambda i: (0, 0)),
                     pl.BlockSpec((1, cout), lambda i: (0, 0))]
        args += [skip_w.reshape(cin_r, cout), skip_b.reshape(1, cout)]

    kern = functools.partial(
        _gn_conv_res_kernel, num_groups=num_groups, eps=eps,
        has_skip=has_skip, n_res=len(res_parts))

    return pl.pallas_call(
        kern,
        out_shape=jax.ShapeDtypeStruct((n, hgt, wdt, cout), h.dtype),
        grid=(n,),
        in_specs=in_specs,
        out_specs=pl.BlockSpec((1, hgt, wdt, cout), lambda i: (i, 0, 0, 0)),
        scratch_shapes=[pltpu.VMEM((hgt + 2, wdt + 2, c), jnp.float32)],
        compiler_params=_COMPILER_PARAMS,
    )(*args)


# ---------------------------------------------------------------------------
# Parameter construction (deterministic, matches PyTorch module shapes)
# ---------------------------------------------------------------------------

def _init_conv(key, kh, kw, cin, cout):
    k_w, k_b = jax.random.split(key)
    return {
        "w": jax.random.normal(k_w, (kh, kw, cin, cout), jnp.float32) * 0.05,
        "b": jax.random.normal(k_b, (cout,), jnp.float32) * 0.05,
    }


def _init_gn(c):
    return {"gamma": jnp.ones((c,), jnp.float32),
            "beta": jnp.zeros((c,), jnp.float32)}


def _init_res_block(key, cin, cout=None):
    cout = cin if cout is None else cout
    k1, k2, k3 = jax.random.split(key, 3)
    return {
        "gn1": _init_gn(cin),
        "conv1": _init_conv(k1, 3, 3, cin, cout),
        "gn2": _init_gn(cout),
        "conv2": _init_conv(k2, 3, 3, cout, cout),
        "skip": _init_conv(k3, 1, 1, cin, cout) if cin != cout else None,
    }


def init_unet(key, in_channels, out_channels, base_channels=64,
              n_layer_blocks=1, channel_multipliers=(1, 2, 4)):
    levels = len(channel_multipliers)
    channels_list = [base_channels * m for m in channel_multipliers]
    channels = base_channels
    keys = iter(jax.random.split(key, 256))

    down = [("conv_in", _init_conv(next(keys), 3, 3, in_channels, channels))]
    input_block_channels = [channels]
    for i in range(levels):
        for _ in range(n_layer_blocks):
            down.append(("res", _init_res_block(next(keys), channels,
                                                channels_list[i])))
            channels = channels_list[i]
            input_block_channels.append(channels)
        if i != levels - 1:
            down.append(("down", _init_conv(next(keys), 3, 3, channels, channels)))
            input_block_channels.append(channels)

    mid = [_init_res_block(next(keys), channels),
           _init_res_block(next(keys), channels)]

    up = []
    for i in reversed(range(levels)):
        for j in range(n_layer_blocks + 1):
            blk = {"res": _init_res_block(
                next(keys), channels + input_block_channels.pop(),
                channels_list[i])}
            channels = channels_list[i]
            if i != 0 and j == n_layer_blocks:
                blk["up"] = _init_conv(next(keys), 3, 3, channels, channels)
            else:
                blk["up"] = None
            up.append(blk)

    conv_out = {"gn": _init_gn(channels),
                "conv": _init_conv(next(keys), 3, 3, channels, out_channels)}
    return {"down": down, "mid": mid, "up": up, "conv_out": conv_out}


# ---------------------------------------------------------------------------
# Forward pass (mirrors UNet.forward)
# ---------------------------------------------------------------------------

def _dummy_gn(c):
    return jnp.zeros((c,), jnp.float32)


def _res_block(p, x_parts):
    """Residual block; x_parts together form the block input (fused concat)."""
    h1 = gn_conv(x_parts, p["gn1"]["gamma"], p["gn1"]["beta"],
                 p["conv1"]["w"], p["conv1"]["b"],
                 stride=1, pad=1, apply_gn=True)
    # drop_rate = 0.0 -> Dropout is an identity
    skip_w = p["skip"]["w"] if p["skip"] is not None else None
    skip_b = p["skip"]["b"] if p["skip"] is not None else None
    return gn_conv_res(h1, p["gn2"]["gamma"], p["gn2"]["beta"],
                       p["conv2"]["w"], p["conv2"]["b"],
                       x_parts, skip_w, skip_b)


def unet_forward(params, x_nchw):
    x = jnp.transpose(x_nchw, (0, 2, 3, 1))  # NCHW -> NHWC
    skips = []
    for kind, p in params["down"]:
        if kind == "conv_in":
            cin = p["w"].shape[2]
            x = gn_conv([x], _dummy_gn(cin), _dummy_gn(cin), p["w"], p["b"],
                        stride=1, pad=1, apply_gn=False)
        elif kind == "res":
            x = _res_block(p, [x])
        else:  # DownSample: Conv3x3 stride 2
            cin = p["w"].shape[2]
            x = gn_conv([x], _dummy_gn(cin), _dummy_gn(cin), p["w"], p["b"],
                        stride=2, pad=1, apply_gn=False)
        skips.append(x)

    for p in params["mid"]:
        x = _res_block(p, [x])

    for blk in params["up"]:
        skip = skips.pop()
        x = _res_block(blk["res"], [x, skip])   # torch.cat fused in-kernel
        if blk["up"] is not None:
            # TODO(synk): nearest-2x interleave kept as plain-JAX glue; fusing
            # it needs a strided/interleaving store path not expressed here.
            x = jnp.repeat(jnp.repeat(x, 2, axis=1), 2, axis=2)
            cin = blk["up"]["w"].shape[2]
            x = gn_conv([x], _dummy_gn(cin), _dummy_gn(cin),
                        blk["up"]["w"], blk["up"]["b"],
                        stride=1, pad=1, apply_gn=False)

    co = params["conv_out"]
    x = gn_conv([x], co["gn"]["gamma"], co["gn"]["beta"],
                co["conv"]["w"], co["conv"]["b"],
                stride=1, pad=1, apply_gn=True)
    return jnp.transpose(x, (0, 3, 1, 2))  # NHWC -> NCHW


# ---------------------------------------------------------------------------

if __name__ == "__main__":
    key = jax.random.PRNGKey(0)
    k_params, k_x = jax.random.split(key)

    # Small config: in=4, out=4, base=32 (keeps GroupNorm(32) valid), 2 levels.
    params = init_unet(k_params, in_channels=4, out_channels=4,
                       base_channels=32, n_layer_blocks=1,
                       channel_multipliers=(1, 2))

    x = jax.random.normal(k_x, (2, 4, 16, 16), jnp.float32)  # NCHW like PyTorch
    y = unet_forward(params, x)
    y = jax.block_until_ready(y)
    assert y.shape == (2, 4, 16, 16) and y.dtype == jnp.float32
    print("KERNEL_OK")
</pallas_src>

<mosaic_0001>
module attributes {stable_mosaic.version = 11 : i64} {
  func.func @_gn_conv_kernel(%arg0: i32, %arg1: memref<1x16x16x4xf32, #tpu.memory_space<vmem>>, %arg2: memref<1x4xf32, #tpu.memory_space<vmem>>, %arg3: memref<1x4xf32, #tpu.memory_space<vmem>>, %arg4: memref<36x32xf32, #tpu.memory_space<vmem>>, %arg5: memref<1x32xf32, #tpu.memory_space<vmem>>, %arg6: memref<1x16x16x32xf32, #tpu.memory_space<vmem>>, %arg7: memref<18x18x4xf32, #tpu.memory_space<vmem>>) attributes {dimension_semantics = [#tpu.dimension_semantics<parallel>], iteration_bounds = array<i64: 2>, scalar_prefetch = 0 : i64, scratch_operands = 1 : i64, tpu.core_type = #tpu.core_type<tc>, window_params = [{transform_indices = @transform_0, window_bounds = array<i64: 1, 16, 16, 4>}, {pipeline_mode = #tpu.pipeline_mode<synchronous>, transform_indices = @transform_1, window_bounds = array<i64: 1, 4>}, {pipeline_mode = #tpu.pipeline_mode<synchronous>, transform_indices = @transform_2, window_bounds = array<i64: 1, 4>}, {pipeline_mode = #tpu.pipeline_mode<synchronous>, transform_indices = @transform_3, window_bounds = array<i64: 36, 32>}, {pipeline_mode = #tpu.pipeline_mode<synchronous>, transform_indices = @transform_4, window_bounds = array<i64: 1, 32>}, {transform_indices = @transform_5, window_bounds = array<i64: 1, 16, 16, 32>}]} {
    %c0 = arith.constant 0 : index
    %c0_0 = arith.constant 0 : index
    %c0_1 = arith.constant 0 : index
    %c0_2 = arith.constant 0 : index
    %0 = vector.load %arg1[%c0, %c0_0, %c0_1, %c0_2] : memref<1x16x16x4xf32, #tpu.memory_space<vmem>>, vector<1x16x16x4xf32>
    %1 = vector.shape_cast %0 : vector<1x16x16x4xf32> to vector<16x16x4xf32>
    %c0_3 = arith.constant 0 : index
    %c0_4 = arith.constant 0 : index
    %2 = vector.load %arg4[%c0_3, %c0_4] : memref<36x32xf32, #tpu.memory_space<vmem>>, vector<36x32xf32>
    %c0_5 = arith.constant 0 : index
    %c0_6 = arith.constant 0 : index
    %3 = vector.load %arg5[%c0_5, %c0_6] : memref<1x32xf32, #tpu.memory_space<vmem>>, vector<1x32xf32>
    %cst = arith.constant 0.000000e+00 : f32
    %4 = vector.broadcast %cst : f32 to vector<18x18x4xf32>
    %c0_7 = arith.constant 0 : index
    %c0_8 = arith.constant 0 : index
    %c0_9 = arith.constant 0 : index
    %5 = vector.load %arg7[%c0_7, %c0_8, %c0_9] : memref<18x18x4xf32, #tpu.memory_space<vmem>>, vector<18x18x4xf32>
    tpu.vector_store %arg7[%c0_7, %c0_8, %c0_9], %4 {strides = array<i32>} : memref<18x18x4xf32, #tpu.memory_space<vmem>>, vector<18x18x4xf32>,
    %c1 = arith.constant 1 : index
    %c1_10 = arith.constant 1 : index
    %c0_11 = arith.constant 0 : index
    %6 = vector.load %arg7[%c1, %c1_10, %c0_11] : memref<18x18x4xf32, #tpu.memory_space<vmem>>, vector<16x16x4xf32>
    tpu.vector_store %arg7[%c1, %c1_10, %c0_11], %1 {strides = array<i32>} : memref<18x18x4xf32, #tpu.memory_space<vmem>>, vector<16x16x4xf32>,
    %c0_12 = arith.constant 0 : index
    %c0_13 = arith.constant 0 : index
    %c0_14 = arith.constant 0 : index
    %7 = vector.load %arg7[%c0_12, %c0_13, %c0_14] : memref<18x18x4xf32, #tpu.memory_space<vmem>>, vector<18x18x4xf32>
    %8 = vector.extract_strided_slice %7 {offsets = [0, 0, 0], sizes = [16, 16, 4], strides = [1, 1, 1]} : vector<18x18x4xf32> to vector<16x16x4xf32>
    %9 = vector.shape_cast %8 : vector<16x16x4xf32> to vector<256x4xf32>
    %10 = vector.extract_strided_slice %7 {offsets = [0, 1, 0], sizes = [16, 16, 4], strides = [1, 1, 1]} : vector<18x18x4xf32> to vector<16x16x4xf32>
    %11 = vector.shape_cast %10 : vector<16x16x4xf32> to vector<256x4xf32>
    %12 = vector.extract_strided_slice %7 {offsets = [0, 2, 0], sizes = [16, 16, 4], strides = [1, 1, 1]} : vector<18x18x4xf32> to vector<16x16x4xf32>
    %13 = vector.shape_cast %12 : vector<16x16x4xf32> to vector<256x4xf32>
    %14 = vector.extract_strided_slice %7 {offsets = [1, 0, 0], sizes = [16, 16, 4], strides = [1, 1, 1]} : vector<18x18x4xf32> to vector<16x16x4xf32>
    %15 = vector.shape_cast %14 : vector<16x16x4xf32> to vector<256x4xf32>
    %16 = vector.extract_strided_slice %7 {offsets = [1, 1, 0], sizes = [16, 16, 4], strides = [1, 1, 1]} : vector<18x18x4xf32> to vector<16x16x4xf32>
    %17 = vector.shape_cast %16 : vector<16x16x4xf32> to vector<256x4xf32>
    %18 = vector.extract_strided_slice %7 {offsets = [1, 2, 0], sizes = [16, 16, 4], strides = [1, 1, 1]} : vector<18x18x4xf32> to vector<16x16x4xf32>
    %19 = vector.shape_cast %18 : vector<16x16x4xf32> to vector<256x4xf32>
    %20 = vector.extract_strided_slice %7 {offsets = [2, 0, 0], sizes = [16, 16, 4], strides = [1, 1, 1]} : vector<18x18x4xf32> to vector<16x16x4xf32>
    %21 = vector.shape_cast %20 : vector<16x16x4xf32> to vector<256x4xf32>
    %22 = vector.extract_strided_slice %7 {offsets = [2, 1, 0], sizes = [16, 16, 4], strides = [1, 1, 1]} : vector<18x18x4xf32> to vector<16x16x4xf32>
    %23 = vector.shape_cast %22 : vector<16x16x4xf32> to vector<256x4xf32>
    %24 = vector.extract_strided_slice %7 {offsets = [2, 2, 0], sizes = [16, 16, 4], strides = [1, 1, 1]} : vector<18x18x4xf32> to vector<16x16x4xf32>
    %25 = vector.shape_cast %24 : vector<16x16x4xf32> to vector<256x4xf32>
    %26 = tpu.concatenate %9, %11, %13, %15, %17, %19, %21, %23, %25 in 1 : vector<256x4xf32>, vector<256x4xf32>, vector<256x4xf32>, vector<256x4xf32>, vector<256x4xf32>, vector<256x4xf32>, vector<256x4xf32>, vector<256x4xf32>, vector<256x4xf32> -> vector<256x36xf32>
    %cst_15 = arith.constant dense<0.000000e+00> : vector<256x32xf32>
    %27 = tpu.matmul %26, %2, %cst_15 {dimension_numbers = #tpu.dot_dimension_numbers<[1], [0], [0], [1], [0, 0, 1, 1], [], []>} : vector<256x36xf32>, vector<36x32xf32>, vector<256x32xf32> -> vector<256x32xf32>
    %28 = vector.broadcast %3 : vector<1x32xf32> to vector<256x32xf32>
    %29 = arith.addf %27, %28 : vector<256x32xf32>
    %30 = vector.shape_cast %29 : vector<256x32xf32> to vector<16x16x32xf32>
    %c0_16 = arith.constant 0 : index
    %c0_17 = arith.constant 0 : index
    %c0_18 = arith.constant 0 : index
    %c0_19 = arith.constant 0 : index
    %31 = vector.load %arg6[%c0_16, %c0_17, %c0_18, %c0_19] : memref<1x16x16x32xf32, #tpu.memory_space<vmem>>, vector<1x16x16x32xf32>
    %32 = vector.shape_cast %31 : vector<1x16x16x32xf32> to vector<16x16x32xf32>
    %33 = vector.shape_cast %30 : vector<16x16x32xf32> to vector<1x16x16x32xf32>
    tpu.vector_store %arg6[%c0_16, %c0_17, %c0_18, %c0_19], %33 {strides = array<i32>} : memref<1x16x16x32xf32, #tpu.memory_space<vmem>>, vector<1x16x16x32xf32>,
    return
  }
  func.func @transform_0(%arg0: i32) -> (i32, i32, i32, i32) {
    %c0_i32 = arith.constant 0 : i32
    %c0_i32_0 = arith.constant 0 : i32
    %c0_i32_1 = arith.constant 0 : i32
    %c0_i32_2 = arith.constant 0 : i32
    return %arg0, %c0_i32, %c0_i32_0, %c0_i32_1 : i32, i32, i32, i32
  }
  func.func @transform_1(%arg0: i32) -> (i32, i32) {
    %c0_i32 = arith.constant 0 : i32
    %c0_i32_0 = arith.constant 0 : i32
    %c0_i32_1 = arith.constant 0 : i32
    return %c0_i32, %c0_i32_0 : i32, i32
  }
  func.func @transform_2(%arg0: i32) -> (i32, i32) {
    %c0_i32 = arith.constant 0 : i32
    %c0_i32_0 = arith.constant 0 : i32
    %c0_i32_1 = arith.constant 0 : i32
    return %c0_i32, %c0_i32_0 : i32, i32
  }
  func.func @transform_3(%arg0: i32) -> (i32, i32) {
    %c0_i32 = arith.constant 0 : i32
    %c0_i32_0 = arith.constant 0 : i32
    %c0_i32_1 = arith.constant 0 : i32
    return %c0_i32, %c0_i32_0 : i32, i32
  }
  func.func @transform_4(%arg0: i32) -> (i32, i32) {
    %c0_i32 = arith.constant 0 : i32
    %c0_i32_0 = arith.constant 0 : i32
    %c0_i32_1 = arith.constant 0 : i32
    return %c0_i32, %c0_i32_0 : i32, i32
  }
  func.func @transform_5(%arg0: i32) -> (i32, i32, i32, i32) {
    %c0_i32 = arith.constant 0 : i32
    %c0_i32_0 = arith.constant 0 : i32
    %c0_i32_1 = arith.constant 0 : i32
    %c0_i32_2 = arith.constant 0 : i32
    return %arg0, %c0_i32, %c0_i32_0, %c0_i32_1 : i32, i32, i32, i32
  }
}

</mosaic_0001>

<llo_original>
// kernel: tpu_custom_call.1
$region0: #{tpu_custom_call.1}
  #allocation0 [shape = 'u32[]', space=smem, size = 0x4, offset = 0x4, fixed_abs, tag = 'smem constant byte address 0x4 - core index']
  #allocation1 [shape = 'u32[144,128]{1,0:T(1,128)}', space=vmem, size = 0x12000, scoped, tag = 'internal scratch']
  #allocation2 [shape = 'f32[18,18,4]{2,1,0:T(8,128)}', space=vmem, size = 0x36000, scoped, tag = 'scratch operand']
  %s0 = inlined_call_operand.hbm [shape: f32[2,16,16,4], index: 0, kind: input, shape index: {}]
  %s1 = inlined_call_operand.hbm [shape: f32[1,4], index: 1, kind: input, shape index: {}]
  %s2 = inlined_call_operand.hbm [shape: f32[1,4], index: 2, kind: input, shape index: {}]
  %s3 = inlined_call_operand.hbm [shape: f32[36,32], index: 3, kind: input, shape index: {}]
  %s4 = inlined_call_operand.hbm [shape: f32[1,32], index: 4, kind: input, shape index: {}]
  %s5 = inlined_call_operand.hbm [shape: f32[2,16,16,32], index: 5, kind: output, shape index: {}]
  %s6 = sld [smem:[#allocation0]]
  $region73: #{tpu_custom_call.1} parent=0
    _
  %s8 = ssub.s32 1, %s6
  %s9 = scalar_select 0, %s8, %s6
  $region1: #{tpu_custom_call.1} parent=0
    #allocation3 [shape = 'u8[262144]{0}', space=vmem, size = 0x40000, scoped, tag = 'input window, operand 0']
    #allocation4 [shape = 's32[2]{0}', space=sflag, size = 0x8, scoped, tag = 'scoped memory for tpu_custom_call.1']
    #allocation5 [shape = 's32[2]{0}', space=sflag, size = 0x8, scoped, tag = 'scoped memory for tpu_custom_call.1']
    #allocation6 [shape = 'u8[512]{0}', space=vmem, size = 0x400, scoped, tag = 'input window, operand 1, single buffered']
    #allocation7 [shape = 's32[1]{0}', space=sflag, size = 0x4, scoped, tag = 'scoped memory for tpu_custom_call.1']
    #allocation8 [shape = 'u8[512]{0}', space=vmem, size = 0x400, scoped, tag = 'input window, operand 2, single buffered']
    #allocation9 [shape = 'u8[20480]{0}', space=vmem, size = 0x5000, scoped, tag = 'input window, operand 3, single buffered']
    #allocation10 [shape = 's32[1]{0}', space=sflag, size = 0x4, scoped, tag = 'scoped memory for tpu_custom_call.1']
    #allocation11 [shape = 'u8[512]{0}', space=vmem, size = 0x400, scoped, tag = 'input window, operand 4, single buffered']
    #allocation12 [shape = 'u8[262144]{0}', space=vmem, size = 0x40000, scoped, tag = 'output window, operand 0']
    %10 = vsyncpa [#allocation4], 0
    %s11 = scalar_lea.sflag [#allocation4], 1
    %12 = vsyncpa %s11, 0
    %13 = vsyncpa [#allocation7], 0
    %14 = vsyncpa [#allocation10], 0
    %15 = vsyncpa [#allocation5], 0
    %s16 = scalar_lea.sflag [#allocation5], 1
    %17 = vsyncpa %s16, 0
    loop: start=0, step=1, limit=4
    $region2: #{tpu_custom_call.1} parent=1 // loop_pre_header
      _
    $region3: #{tpu_custom_call.1} parent=1 // loop_header
      %s19 = sphi 0, %s23
      %p20 = scmp.ge.s32.totalorder %s19, 4
      %s29 = sphi 0, %s31
      %s32 = sphi 0, %s29
      %s33 = sphi 0, %s32
      %s49 = sphi 0, %s33
      %s53 = sphi 0, %s53
      %s55 = sphi 0, %s53
      %s56 = sphi 0, %s55
      %s70 = sphi 0, %s56
      %s74 = sphi 0, %s74
      %s76 = sphi 0, %s74
      %s77 = sphi 0, %s76
      %s91 = sphi 0, %s77
      %s95 = sphi 0, %s95
      %s97 = sphi 0, %s95
      %s98 = sphi 0, %s97
      %s112 = sphi 0, %s98
      %s116 = sphi 0, %s116
      %s118 = sphi 0, %s116
      %s119 = sphi 0, %s118
      %s133 = sphi 0, %s119
      %s139 = sphi 0, %s141
      %s142 = sphi 0, %s139
      %s143 = sphi 0, %s142
      %s159 = sphi 0, %s143
    $region4: #{tpu_custom_call.1} parent=1 // loop_header_branch
      %22 = sbr.rel (%p20) target = $region8
    $region5: #{tpu_custom_call.1} parent=1 // loop_body
      %s24 = ssub.s32 %s19, 1
      %s25 = ssub.s32 %s19, 2
      %s26 = sadd.s32 %s19, 1
      %s27 = ssub.s32 %s19, %s26
      %p28 = scmp.eq.s32.totalorder %s27, 0
      %s30 = sadd.s32 %s29, 1
      %s31 = scalar_select %p28, %s29, %s30
      %p34 = pneg %p28
      %p35 = scmp.eq.s32.totalorder %s19, 1
      %p36 = por %p34, %p35
      %p37 = scmp.ne.s32.totalorder %s29, %s32
      %p38 = scmp.eq.s32.totalorder %s19, 0
      %p39 = por %p37, %p38
      %p40 = scmp.ne.s32.totalorder %s29, %s32
      %p41 = scmp.eq.s32.totalorder %s24, 1
      %p42 = por %p40, %p41
      %p43 = scmp.ne.s32.totalorder %s32, %s33
      %p44 = scmp.eq.s32.totalorder %s24, 0
      %p45 = por %p43, %p44
      %p46 = scmp.ne.s32.totalorder %s32, %s33
      %p47 = scmp.eq.s32.totalorder %s25, 1
      %p48 = por %p46, %p47
      %p50 = scmp.ne.s32.totalorder %s33, %s49
      %p51 = scmp.eq.s32.totalorder %s25, 0
      %p52 = por %p50, %p51
      %s54 = sadd.s32 %s53, 1
      %p57 = scmp.eq.s32.totalorder %s19, 1
      %p58 = scmp.ne.s32.totalorder %s53, %s55
      %p59 = scmp.eq.s32.totalorder %s19, 0
      %p60 = por %p58, %p59
      %p61 = scmp.ne.s32.totalorder %s53, %s55
      %p62 = scmp.eq.s32.totalorder %s24, 1
      %p63 = por %p61, %p62
      %p64 = scmp.ne.s32.totalorder %s55, %s56
      %p65 = scmp.eq.s32.totalorder %s24, 0
      %p66 = por %p64, %p65
      %p67 = scmp.ne.s32.totalorder %s55, %s56
      %p68 = scmp.eq.s32.totalorder %s25, 1
      %p69 = por %p67, %p68
      %p71 = scmp.ne.s32.totalorder %s56, %s70
      %p72 = scmp.eq.s32.totalorder %s25, 0
      %p73 = por %p71, %p72
      %s75 = sadd.s32 %s74, 1
      %p78 = scmp.eq.s32.totalorder %s19, 1
      %p79 = scmp.ne.s32.totalorder %s74, %s76
      %p80 = scmp.eq.s32.totalorder %s19, 0
      %p81 = por %p79, %p80
      %p82 = scmp.ne.s32.totalorder %s74, %s76
      %p83 = scmp.eq.s32.totalorder %s24, 1
      %p84 = por %p82, %p83
      %p85 = scmp.ne.s32.totalorder %s76, %s77
      %p86 = scmp.eq.s32.totalorder %s24, 0
      %p87 = por %p85, %p86
      %p88 = scmp.ne.s32.totalorder %s76, %s77
      %p89 = scmp.eq.s32.totalorder %s25, 1
      %p90 = por %p88, %p89
      %p92 = scmp.ne.s32.totalorder %s77, %s91
      %p93 = scmp.eq.s32.totalorder %s25, 0
      %p94 = por %p92, %p93
      %s96 = sadd.s32 %s95, 1
      %p99 = scmp.eq.s32.totalorder %s19, 1
      %p100 = scmp.ne.s32.totalorder %s95, %s97
      %p101 = scmp.eq.s32.totalorder %s19, 0
      %p102 = por %p100, %p101
      %p103 = scmp.ne.s32.totalorder %s95, %s97
      %p104 = scmp.eq.s32.totalorder %s24, 1
      %p105 = por %p103, %p104
      %p106 = scmp.ne.s32.totalorder %s97, %s98
      %p107 = scmp.eq.s32.totalorder %s24, 0
      %p108 = por %p106, %p107
      %p109 = scmp.ne.s32.totalorder %s97, %s98
      %p110 = scmp.eq.s32.totalorder %s25, 1
      %p111 = por %p109, %p110
      %p113 = scmp.ne.s32.totalorder %s98, %s112
      %p114 = scmp.eq.s32.totalorder %s25, 0
      %p115 = por %p113, %p114
      %s117 = sadd.s32 %s116, 1
      %p120 = scmp.eq.s32.totalorder %s19, 1
      %p121 = scmp.ne.s32.totalorder %s116, %s118
      %p122 = scmp.eq.s32.totalorder %s19, 0
      %p123 = por %p121, %p122
      %p124 = scmp.ne.s32.totalorder %s116, %s118
      %p125 = scmp.eq.s32.totalorder %s24, 1
      %p126 = por %p124, %p125
      %p127 = scmp.ne.s32.totalorder %s118, %s119
      %p128 = scmp.eq.s32.totalorder %s24, 0
      %p129 = por %p127, %p128
      %p130 = scmp.ne.s32.totalorder %s118, %s119
      %p131 = scmp.eq.s32.totalorder %s25, 1
      %p132 = por %p130, %p131
      %p134 = scmp.ne.s32.totalorder %s119, %s133
      %p135 = scmp.eq.s32.totalorder %s25, 0
      %p136 = por %p134, %p135
      %s137 = ssub.s32 %s19, %s26
      %p138 = scmp.eq.s32.totalorder %s137, 0
      %s140 = sadd.s32 %s139, 1
      %s141 = scalar_select %p138, %s139, %s140
      %p144 = pneg %p138
      %p145 = scmp.eq.s32.totalorder %s19, 1
      %p146 = por %p144, %p145
      %p147 = scmp.ne.s32.totalorder %s139, %s142
      %p148 = scmp.eq.s32.totalorder %s19, 0
      %p149 = por %p147, %p148
      %p150 = scmp.ne.s32.totalorder %s139, %s142
      %p151 = scmp.eq.s32.totalorder %s24, 1
      %p152 = por %p150, %p151
      %p153 = scmp.ne.s32.totalorder %s142, %s143
      %p154 = scmp.eq.s32.totalorder %s24, 0
      %p155 = por %p153, %p154
      %p156 = scmp.ne.s32.totalorder %s142, %s143
      %p157 = scmp.eq.s32.totalorder %s25, 1
      %p158 = por %p156, %p157
      %p160 = scmp.ne.s32.totalorder %s143, %s159
      %p161 = scmp.eq.s32.totalorder %s25, 0
      %p162 = por %p160, %p161
      %p163 = scmp.le.s32.totalorder 1, %s19
      %p164 = scmp.lt.s32.totalorder %s19, 3
      %p165 = pnand %p163, %p164
      %p166 = pneg %p165
      // Predicated region
      $region9: #{tpu_custom_call.1} parent=5 // pred_check
        _
      $region10: #{tpu_custom_call.1} parent=5 // pred_check_branch
        %168 = sbr.rel (%p165) target = $region12
      $region11: #{tpu_custom_call.1} parent=5 // pred_region
        %s169 = ssub.s32 %s19, 1
        // Predicated region
        $region13: #{tpu_custom_call.1} parent=11 // pred_check
          %p170 = pneg %p66
        $region14: #{tpu_custom_call.1} parent=11 // pred_check_branch
          %172 = sbr.rel (%p170) target = $region16
        $region15: #{tpu_custom_call.1} parent=11 // pred_region
          %s174 = ssub.s32 16, 16
          %175 = vsyncadd [#allocation7], %s174
          %s177 = sshll.u32 [#allocation6], 4
          %s178 = int_to_ptr.vmem [resolvable:$true] %s177
          %180 = dma.hbm_to_vmem [thread:$0]  %s1, 16, %s178, [#allocation7]
        $region16: #{tpu_custom_call.1} parent=11 // pred_fallthru
          _
        // Predicated region
        $region17: #{tpu_custom_call.1} parent=11 // pred_check
          %p181 = pneg %p87
        $region18: #{tpu_custom_call.1} parent=11 // pred_check_branch
          %183 = sbr.rel (%p181) target = $region20
        $region19: #{tpu_custom_call.1} parent=11 // pred_region
          %s185 = ssub.s32 16, 16
          %186 = vsyncadd [#allocation7], %s185
          %s188 = sshll.u32 [#allocation8], 4
          %s189 = int_to_ptr.vmem [resolvable:$true] %s188
          %191 = dma.hbm_to_vmem [thread:$0]  %s2, 16, %s189, [#allocation7]
        $region20: #{tpu_custom_call.1} parent=11 // pred_fallthru
          _
        // Predicated region
        $region21: #{tpu_custom_call.1} parent=11 // pred_check
          %p192 = pneg %p108
        $region22: #{tpu_custom_call.1} parent=11 // pred_check_branch
          %194 = sbr.rel (%p192) target = $region24
        $region23: #{tpu_custom_call.1} parent=11 // pred_region
          %s196 = ssub.s32 640, 640
          %197 = vsyncadd [#allocation10], %s196
          %s198 = sshll.u32 [#allocation9], 4
          %s199 = int_to_ptr.vmem [resolvable:$true] %s198
          %204 = dma.hbm_to_vmem [thread:$0]  %s3, 640, %s199, [#allocation10], 128, 128, 8
        $region24: #{tpu_custom_call.1} parent=11 // pred_fallthru
          _
        // Predicated region
        $region25: #{tpu_custom_call.1} parent=11 // pred_check
          %p205 = pneg %p129
        $region26: #{tpu_custom_call.1} parent=11 // pred_check_branch
          %207 = sbr.rel (%p205) target = $region28
        $region27: #{tpu_custom_call.1} parent=11 // pred_region
          %s209 = ssub.s32 16, 16
          %210 = vsyncadd [#allocation10], %s209
          %s212 = sshll.u32 [#allocation11], 4
          %s213 = int_to_ptr.vmem [resolvable:$true] %s212
          %215 = dma.hbm_to_vmem [thread:$0]  %s4, 16, %s213, [#allocation10]
        $region28: #{tpu_custom_call.1} parent=11 // pred_fallthru
          _
      $region12: #{tpu_custom_call.1} parent=5 // pred_fallthru
        _
      %p216 = scmp.lt.s32.totalorder %s19, 2
      // Predicated region
      $region29: #{tpu_custom_call.1} parent=5 // pred_check
        %p217 = pneg %p216
      $region30: #{tpu_custom_call.1} parent=5 // pred_check_branch
        %219 = sbr.rel (%p217) target = $region32
      $region31: #{tpu_custom_call.1} parent=5 // pred_region
        // Predicated region
        $region33: #{tpu_custom_call.1} parent=31 // pred_check
          %p220 = pneg %p39
        $region34: #{tpu_custom_call.1} parent=31 // pred_check_branch
          %222 = sbr.rel (%p220) target = $region36
        $region35: #{tpu_custom_call.1} parent=31 // pred_region
          %s223 = sand.u32 %s29, 1
          %s224 = scalar_lea.sflag [#allocation4], %s223
          %s225 = sand.u32 %s29, 1
          %s226 = smul.addr %s225, 256
          %s227 = scalar_lea.vmem [#allocation3], %s226
          %s229 = ssub.s32 4096, 4096
          %230 = vsyncadd %s224, %s229
          %s231 = smul.addr %s19, 32
          %s232 = smul.addr %s231, 128
          %s233 = scalar_lea.hbm %s0, %s232
          %s234 = sshll.u32 %s227, 4
          %s235 = int_to_ptr.vmem [resolvable:$true] %s234
          %240 = dma.hbm_to_vmem [thread:$0]  %s233, 4096, %s235, %s224, 128, 128, 8
        $region36: #{tpu_custom_call.1} parent=31 // pred_fallthru
          _
      $region32: #{tpu_custom_call.1} parent=5 // pred_fallthru
        _
      %p241 = scmp.le.s32.totalorder 1, %s19
      %p242 = scmp.lt.s32.totalorder %s19, 3
      %p243 = pnand %p241, %p242
      %p244 = pneg %p243
      // Predicated region
      $region37: #{tpu_custom_call.1} parent=5 // pred_check
        _
      $region38: #{tpu_custom_call.1} parent=5 // pred_check_branch
        %246 = sbr.rel (%p243) target = $region40
      $region39: #{tpu_custom_call.1} parent=5 // pred_region
        %s247 = ssub.s32 %s19, 1
        %s248 = sand.u32 %s32, 1
        %s249 = scalar_lea.sflag [#allocation4], %s248
        %s250 = sand.u32 %s32, 1
        %s251 = smul.addr %s250, 256
        %s252 = scalar_lea.vmem [#allocation3], %s251
        // Predicated region
        $region41: #{tpu_custom_call.1} parent=39 // pred_check
          %p253 = pneg %p45
        $region42: #{tpu_custom_call.1} parent=39 // pred_check_branch
          %255 = sbr.rel (%p253) target = $region44
        $region43: #{tpu_custom_call.1} parent=39 // pred_region
          %256 = dma.done %s249, 4096
        $region44: #{tpu_custom_call.1} parent=39 // pred_fallthru
          _
        // Predicated region
        $region45: #{tpu_custom_call.1} parent=39 // pred_check
          %p257 = pneg %p66
        $region46: #{tpu_custom_call.1} parent=39 // pred_check_branch
          %259 = sbr.rel (%p257) target = $region48
        $region47: #{tpu_custom_call.1} parent=39 // pred_region
          %260 = dma.done [#allocation7], 16
        $region48: #{tpu_custom_call.1} parent=39 // pred_fallthru
          _
        // Predicated region
        $region49: #{tpu_custom_call.1} parent=39 // pred_check
          %p261 = pneg %p87
        $region50: #{tpu_custom_call.1} parent=39 // pred_check_branch
          %263 = sbr.rel (%p261) target = $region52
        $region51: #{tpu_custom_call.1} parent=39 // pred_region
          %264 = dma.done [#allocation7], 16
        $region52: #{tpu_custom_call.1} parent=39 // pred_fallthru
          _
        // Predicated region
        $region53: #{tpu_custom_call.1} parent=39 // pred_check
          %p265 = pneg %p108
        $region54: #{tpu_custom_call.1} parent=39 // pred_check_branch
          %267 = sbr.rel (%p265) target = $region56
        $region55: #{tpu_custom_call.1} parent=39 // pred_region
          %268 = dma.done [#allocation10], 640
        $region56: #{tpu_custom_call.1} parent=39 // pred_fallthru
          _
        // Predicated region
        $region57: #{tpu_custom_call.1} parent=39 // pred_check
          %p269 = pneg %p129
        $region58: #{tpu_custom_call.1} parent=39 // pred_check_branch
          %271 = sbr.rel (%p269) target = $region60
        $region59: #{tpu_custom_call.1} parent=39 // pred_region
          %272 = dma.done [#allocation10], 16
        $region60: #{tpu_custom_call.1} parent=39 // pred_fallthru
          _
        %s273 = sand.u32 %s32, 1
        %s274 = scalar_lea.sflag [#allocation4], %s273
        %s275 = sand.u32 %s32, 1
        %s276 = smul.addr %s275, 256
        %s277 = scalar_lea.vmem [#allocation3], %s276
        %p278 = pneg %p45
        %p279 = pneg %p42
        %p280 = pneg %p66
        %p281 = pneg %p63
        %p282 = pneg %p87
        %p283 = pneg %p84
        %p284 = pneg %p108
        %p285 = pneg %p105
        %p286 = pneg %p129
        %p287 = pneg %p126
        %p288 = pneg %p155
        %p289 = pneg %p152
        %s290 = sand.u32 %s142, 1
        %s291 = scalar_lea.sflag [#allocation5], %s290
        %s292 = sand.u32 %s142, 1
        %s293 = smul.addr %s292, 256
        %s294 = scalar_lea.vmem [#allocation12], %s293
        %v295 = vld [vmem:[%s252] sm:$0xff]
        %v296 = vld [vmem:[%s252 + $0x8] sm:$0xff]
        %v297 = vld [vmem:[%s252 + $0x10] sm:$0xff]
        %v298 = vld [vmem:[%s252 + $0x18] sm:$0xff]
        %v299 = vld [vmem:[%s252 + $0x20] sm:$0xff]
        %v300 = vld [vmem:[%s252 + $0x28] sm:$0xff]
        %v301 = vld [vmem:[%s252 + $0x30] sm:$0xff]
        %v302 = vld [vmem:[%s252 + $0x38] sm:$0xff]
        %v303 = vld [vmem:[%s252 + $0x40] sm:$0xff]
        %v304 = vld [vmem:[%s252 + $0x48] sm:$0xff]
        %v305 = vld [vmem:[%s252 + $0x50] sm:$0xff]
        %v306 = vld [vmem:[%s252 + $0x58] sm:$0xff]
        %v307 = vld [vmem:[%s252 + $0x60] sm:$0xff]
        %v308 = vld [vmem:[%s252 + $0x68] sm:$0xff]
        %v309 = vld [vmem:[%s252 + $0x70] sm:$0xff]
        %v310 = vld [vmem:[%s252 + $0x78] sm:$0xff]
        %v311 = vld [vmem:[%s252 + $0x80] sm:$0xff]
        %v312 = vld [vmem:[%s252 + $0x88] sm:$0xff]
        %v313 = vld [vmem:[%s252 + $0x90] sm:$0xff]
        %v314 = vld [vmem:[%s252 + $0x98] sm:$0xff]
        %v315 = vld [vmem:[%s252 + $0xa0] sm:$0xff]
        %v316 = vld [vmem:[%s252 + $0xa8] sm:$0xff]
        %v317 = vld [vmem:[%s252 + $0xb0] sm:$0xff]
        %v318 = vld [vmem:[%s252 + $0xb8] sm:$0xff]
        %v319 = vld [vmem:[%s252 + $0xc0] sm:$0xff]
        %v320 = vld [vmem:[%s252 + $0xc8] sm:$0xff]
        %v321 = vld [vmem:[%s252 + $0xd0] sm:$0xff]
        %v322 = vld [vmem:[%s252 + $0xd8] sm:$0xff]
        %v323 = vld [vmem:[%s252 + $0xe0] sm:$0xff]
        %v324 = vld [vmem:[%s252 + $0xe8] sm:$0xff]
        %v325 = vld [vmem:[%s252 + $0xf0] sm:$0xff]
        %v326 = vld [vmem:[%s252 + $0xf8] sm:$0xff]
        %v327 = vld [vmem:[#allocation9] sm:$0xff]
        %v328 = vld [vmem:[#allocation9 + $0x8] sm:$0xff]
        %v329 = vld [vmem:[#allocation9 + $0x10] sm:$0xff]
        %v330 = vld [vmem:[#allocation9 + $0x18] sm:$0xff]
        %v331 = vld [vmem:[#allocation9 + $0x20] sm:$0xf]
        %v332 = vld [vmem:[#allocation11] sm:$0x1]
        %vm333 = vcmask 31744
        %334 = vst.msk [vmem:[#allocation2] sm:$0xff] %vm333, 0.0
        %335 = vst.msk [vmem:[#allocation2 + $0x8] sm:$0xff] %vm333, 0.0
        %vm336 = vcmask 25600
        %337 = vst.msk [vmem:[#allocation2 + $0x10] sm:$0x3] %vm336, 0.0
        %338 = vst.msk [vmem:[#allocation2 + $0x18] sm:$0xff] %vm333, 0.0
        %339 = vst.msk [vmem:[#allocation2 + $0x20] sm:$0xff] %vm333, 0.0
        %340 = vst.msk [vmem:[#allocation2 + $0x28] sm:$0x3] %vm336, 0.0
        %341 = vst.msk [vmem:[#allocation2 + $0x30] sm:$0xff] %vm333, 0.0
        %342 = vst.msk [vmem:[#allocation2 + $0x38] sm:$0xff] %vm333, 0.0
        %343 = vst.msk [vmem:[#allocation2 + $0x40] sm:$0x3] %vm336, 0.0
        %344 = vst.msk [vmem:[#allocation2 + $0x48] sm:$0xff] %vm333, 0.0
        %345 = vst.msk [vmem:[#allocation2 + $0x50] sm:$0xff] %vm333, 0.0
        %346 = vst.msk [vmem:[#allocation2 + $0x58] sm:$0x3] %vm336, 0.0
        %347 = vst.msk [vmem:[#allocation2 + $0x60] sm:$0xff] %vm333, 0.0
        %348 = vst.msk [vmem:[#allocation2 + $0x68] sm:$0xff] %vm333, 0.0
        %349 = vst.msk [vmem:[#allocation2 + $0x70] sm:$0x3] %vm336, 0.0
        %350 = vst.msk [vmem:[#allocation2 + $0x78] sm:$0xff] %vm333, 0.0
        %351 = vst.msk [vmem:[#allocation2 + $0x80] sm:$0xff] %vm333, 0.0
        %352 = vst.msk [vmem:[#allocation2 + $0x88] sm:$0x3] %vm336, 0.0
        %353 = vst.msk [vmem:[#allocation2 + $0x90] sm:$0xff] %vm333, 0.0
        %354 = vst.msk [vmem:[#allocation2 + $0x98] sm:$0xff] %vm333, 0.0
        %355 = vst.msk [vmem:[#allocation2 + $0xa0] sm:$0x3] %vm336, 0.0
        %356 = vst.msk [vmem:[#allocation2 + $0xa8] sm:$0xff] %vm333, 0.0
        %357 = vst.msk [vmem:[#allocation2 + $0xb0] sm:$0xff] %vm333, 0.0
        %358 = vst.msk [vmem:[#allocation2 + $0xb8] sm:$0x3] %vm336, 0.0
        %359 = vst.msk [vmem:[#allocation2 + $0xc0] sm:$0xff] %vm333, 0.0
        %360 = vst.msk [vmem:[#allocation2 + $0xc8] sm:$0xff] %vm333, 0.0
        %361 = vst.msk [vmem:[#allocation2 + $0xd0] sm:$0x3] %vm336, 0.0
        %362 = vst.msk [vmem:[#allocation2 + $0xd8] sm:$0xff] %vm333, 0.0
        %363 = vst.msk [vmem:[#allocation2 + $0xe0] sm:$0xff] %vm333, 0.0
        %364 = vst.msk [vmem:[#allocation2 + $0xe8] sm:$0x3] %vm336, 0.0
        %365 = vst.msk [vmem:[#allocation2 + $0xf0] sm:$0xff] %vm333, 0.0
        %366 = vst.msk [vmem:[#allocation2 + $0xf8] sm:$0xff] %vm333, 0.0
        %367 = vst.msk [vmem:[#allocation2 + $0x100] sm:$0x3] %vm336, 0.0
        %368 = vst.msk [vmem:[#allocation2 + $0x108] sm:$0xff] %vm333, 0.0
        %369 = vst.msk [vmem:[#allocation2 + $0x110] sm:$0xff] %vm333, 0.0
        %370 = vst.msk [vmem:[#allocation2 + $0x118] sm:$0x3] %vm336, 0.0
        %371 = vst.msk [vmem:[#allocation2 + $0x120] sm:$0xff] %vm333, 0.0
        %372 = vst.msk [vmem:[#allocation2 + $0x128] sm:$0xff] %vm333, 0.0
        %373 = vst.msk [vmem:[#allocation2 + $0x130] sm:$0x3] %vm336, 0.0
        %374 = vst.msk [vmem:[#allocation2 + $0x138] sm:$0xff] %vm333, 0.0
        %375 = vst.msk [vmem:[#allocation2 + $0x140] sm:$0xff] %vm333, 0.0
        %376 = vst.msk [vmem:[#allocation2 + $0x148] sm:$0x3] %vm336, 0.0
        %377 = vst.msk [vmem:[#allocation2 + $0x150] sm:$0xff] %vm333, 0.0
        %378 = vst.msk [vmem:[#allocation2 + $0x158] sm:$0xff] %vm333, 0.0
        %379 = vst.msk [vmem:[#allocation2 + $0x160] sm:$0x3] %vm336, 0.0
        %380 = vst.msk [vmem:[#allocation2 + $0x168] sm:$0xff] %vm333, 0.0
        %381 = vst.msk [vmem:[#allocation2 + $0x170] sm:$0xff] %vm333, 0.0
        %382 = vst.msk [vmem:[#allocation2 + $0x178] sm:$0x3] %vm336, 0.0
        %383 = vst.msk [vmem:[#allocation2 + $0x180] sm:$0xff] %vm333, 0.0
        %384 = vst.msk [vmem:[#allocation2 + $0x188] sm:$0xff] %vm333, 0.0
        %385 = vst.msk [vmem:[#allocation2 + $0x190] sm:$0x3] %vm336, 0.0
        %386 = vst.msk [vmem:[#allocation2 + $0x198] sm:$0xff] %vm333, 0.0
        %387 = vst.msk [vmem:[#allocation2 + $0x1a0] sm:$0xff] %vm333, 0.0
        %388 = vst.msk [vmem:[#allocation2 + $0x1a8] sm:$0x3] %vm336, 0.0
        %s389 = scalar_lea.vmem [#allocation2], 24
        %390 = vst.msk [vmem:[%s389 + $0x1] sm:$0xff] %vm333, %v295
        %391 = vst.msk [vmem:[%s389 + $0x9] sm:$0xff] %vm333, %v296
        %392 = vst.msk [vmem:[%s389 + $0x19] sm:$0xff] %vm333, %v297
        %393 = vst.msk [vmem:[%s389 + $0x21] sm:$0xff] %vm333, %v298
        %394 = vst.msk [vmem:[%s389 + $0x31] sm:$0xff] %vm333, %v299
        %395 = vst.msk [vmem:[%s389 + $0x39] sm:$0xff] %vm333, %v300
        %396 = vst.msk [vmem:[%s389 + $0x49] sm:$0xff] %vm333, %v301
        %397 = vst.msk [vmem:[%s389 + $0x51] sm:$0xff] %vm333, %v302
        %398 = vst.msk [vmem:[%s389 + $0x61] sm:$0xff] %vm333, %v303
        %399 = vst.msk [vmem:[%s389 + $0x69] sm:$0xff] %vm333, %v304
        %400 = vst.msk [vmem:[%s389 + $0x79] sm:$0xff] %vm333, %v305
        %401 = vst.msk [vmem:[%s389 + $0x81] sm:$0xff] %vm333, %v306
        %402 = vst.msk [vmem:[%s389 + $0x91] sm:$0xff] %vm333, %v307
        %403 = vst.msk [vmem:[%s389 + $0x99] sm:$0xff] %vm333, %v308
        %404 = vst.msk [vmem:[%s389 + $0xa9] sm:$0xff] %vm333, %v309
        %405 = vst.msk [vmem:[%s389 + $0xb1] sm:$0xff] %vm333, %v310
        %406 = vst.msk [vmem:[%s389 + $0xc1] sm:$0xff] %vm333, %v311
        %407 = vst.msk [vmem:[%s389 + $0xc9] sm:$0xff] %vm333, %v312
        %408 = vst.msk [vmem:[%s389 + $0xd9] sm:$0xff] %vm333, %v313
        %409 = vst.msk [vmem:[%s389 + $0xe1] sm:$0xff] %vm333, %v314
        %410 = vst.msk [vmem:[%s389 + $0xf1] sm:$0xff] %vm333, %v315
        %411 = vst.msk [vmem:[%s389 + $0xf9] sm:$0xff] %vm333, %v316
        %412 = vst.msk [vmem:[%s389 + $0x109] sm:$0xff] %vm333, %v317
        %413 = vst.msk [vmem:[%s389 + $0x111] sm:$0xff] %vm333, %v318
        %414 = vst.msk [vmem:[%s389 + $0x121] sm:$0xff] %vm333, %v319
        %415 = vst.msk [vmem:[%s389 + $0x129] sm:$0xff] %vm333, %v320
        %416 = vst.msk [vmem:[%s389 + $0x139] sm:$0xff] %vm333, %v321
        %417 = vst.msk [vmem:[%s389 + $0x141] sm:$0xff] %vm333, %v322
        %418 = vst.msk [vmem:[%s389 + $0x151] sm:$0xff] %vm333, %v323
        %419 = vst.msk [vmem:[%s389 + $0x159] sm:$0xff] %vm333, %v324
        %420 = vst.msk [vmem:[%s389 + $0x169] sm:$0xff] %vm333, %v325
        %421 = vst.msk [vmem:[%s389 + $0x171] sm:$0xff] %vm333, %v326
        %v422 = vld [vmem:[#allocation2] sm:$0xff]
        %v423 = vld [vmem:[#allocation2 + $0x8] sm:$0xff]
        %v424 = vld [vmem:[#allocation2 + $0x10] sm:$0x3]
        %v425 = vld [vmem:[#allocation2 + $0x18] sm:$0xff]
        %v426 = vld [vmem:[#allocation2 + $0x20] sm:$0xff]
        %v427 = vld [vmem:[#allocation2 + $0x28] sm:$0x3]
        %v428 = vld [vmem:[#allocation2 + $0x30] sm:$0xff]
        %v429 = vld [vmem:[#allocation2 + $0x38] sm:$0xff]
        %v430 = vld [vmem:[#allocation2 + $0x40] sm:$0x3]
        %v431 = vld [vmem:[#allocation2 + $0x48] sm:$0xff]
        %v432 = vld [vmem:[#allocation2 + $0x50] sm:$0xff]
        %v433 = vld [vmem:[#allocation2 + $0x58] sm:$0x3]
        %v434 = vld [vmem:[#allocation2 + $0x60] sm:$0xff]
        %v435 = vld [vmem:[#allocation2 + $0x68] sm:$0xff]
        %v436 = vld [vmem:[#allocation2 + $0x70] sm:$0x3]
        %v437 = vld [vmem:[#allocation2 + $0x78] sm:$0xff]
        %v438 = vld [vmem:[#allocation2 + $0x80] sm:$0xff]
        %v439 = vld [vmem:[#allocation2 + $0x88] sm:$0x3]
        %v440 = vld [vmem:[#allocation2 + $0x90] sm:$0xff]
        %v441 = vld [vmem:[#allocation2 + $0x98] sm:$0xff]
        %v442 = vld [vmem:[#allocation2 + $0xa0] sm:$0x3]
        %v443 = vld [vmem:[#allocation2 + $0xa8] sm:$0xff]
        %v444 = vld [vmem:[#allocation2 + $0xb0] sm:$0xff]
        %v445 = vld [vmem:[#allocation2 + $0xb8] sm:$0x3]
        %v446 = vld [vmem:[#allocation2 + $0xc0] sm:$0xff]
        %v447 = vld [vmem:[#allocation2 + $0xc8] sm:$0xff]
        %v448 = vld [vmem:[#allocation2 + $0xd0] sm:$0x3]
        %v449 = vld [vmem:[#allocation2 + $0xd8] sm:$0xff]
        %v450 = vld [vmem:[#allocation2 + $0xe0] sm:$0xff]
        %v451 = vld [vmem:[#allocation2 + $0xe8] sm:$0x3]
        %v452 = vld [vmem:[#allocation2 + $0xf0] sm:$0xff]
        %v453 = vld [vmem:[#allocation2 + $0xf8] sm:$0xff]
        %v454 = vld [vmem:[#allocation2 + $0x100] sm:$0x3]
        %v455 = vld [vmem:[#allocation2 + $0x108] sm:$0xff]
        %v456 = vld [vmem:[#allocation2 + $0x110] sm:$0xff]
        %v457 = vld [vmem:[#allocation2 + $0x118] sm:$0x3]
        %v458 = vld [vmem:[#allocation2 + $0x120] sm:$0xff]
        %v459 = vld [vmem:[#allocation2 + $0x128] sm:$0xff]
        %v460 = vld [vmem:[#allocation2 + $0x130] sm:$0x3]
        %v461 = vld [vmem:[#allocation2 + $0x138] sm:$0xff]
        %v462 = vld [vmem:[#allocation2 + $0x140] sm:$0xff]
        %v463 = vld [vmem:[#allocation2 + $0x148] sm:$0x3]
        %v464 = vld [vmem:[#allocation2 + $0x150] sm:$0xff]
        %v465 = vld [vmem:[#allocation2 + $0x158] sm:$0xff]
        %v466 = vld [vmem:[#allocation2 + $0x160] sm:$0x3]
        %v467 = vld [vmem:[#allocation2 + $0x168] sm:$0xff]
        %v468 = vld [vmem:[#allocation2 + $0x170] sm:$0xff]
        %v469 = vld [vmem:[#allocation2 + $0x178] sm:$0x3]
        %v470 = vld [vmem:[#allocation2 + $0x180] sm:$0xff]
        %v471 = vld [vmem:[#allocation2 + $0x188] sm:$0xff]
        %v472 = vld [vmem:[#allocation2 + $0x190] sm:$0x3]
        %v473 = vld [vmem:[#allocation2 + $0x198] sm:$0xff]
        %v474 = vld [vmem:[#allocation2 + $0x1a0] sm:$0xff]
        %v475 = vld [vmem:[#allocation2 + $0x1a8] sm:$0x3]
        %vm524 = vcmask 1046528
        %v525 = vrot.slane %v422, 1
        %v526 = vrot.slane %v423, 1
        %v527 = vsel %vm524, %v525, %v526
        %v528 = vrot.slane %v424, 1
        %v529 = vsel %vm524, %v526, %v528
        %v530 = vrot.slane %v425, 1
        %v531 = vrot.slane %v426, 1
        %v532 = vsel %vm524, %v530, %v531
        %v533 = vrot.slane %v427, 1
        %v534 = vsel %vm524, %v531, %v533
        %v535 = vrot.slane %v428, 1
        %v536 = vrot.slane %v429, 1
        %v537 = vsel %vm524, %v535, %v536
        %v538 = vrot.slane %v430, 1
        %v539 = vsel %vm524, %v536, %v538
        %v540 = vrot.slane %v431, 1
        %v541 = vrot.slane %v432, 1
        %v542 = vsel %vm524, %v540, %v541
        %v543 = vrot.slane %v433, 1
        %v544 = vsel %vm524, %v541, %v543
        %v545 = vrot.slane %v434, 1
        %v546 = vrot.slane %v435, 1
        %v547 = vsel %vm524, %v545, %v546
        %v548 = vrot.slane %v436, 1
        %v549 = vsel %vm524, %v546, %v548
        %v550 = vrot.slane %v437, 1
        %v551 = vrot.slane %v438, 1
        %v552 = vsel %vm524, %v550, %v551
        %v553 = vrot.slane %v439, 1
        %v554 = vsel %vm524, %v551, %v553
        %v555 = vrot.slane %v440, 1
        %v556 = vrot.slane %v441, 1
        %v557 = vsel %vm524, %v555, %v556
        %v558 = vrot.slane %v442, 1
        %v559 = vsel %vm524, %v556, %v558
        %v560 = vrot.slane %v443, 1
        %v561 = vrot.slane %v444, 1
        %v562 = vsel %vm524, %v560, %v561
        %v563 = vrot.slane %v445, 1
        %v564 = vsel %vm524, %v561, %v563
        %v565 = vrot.slane %v446, 1
        %v566 = vrot.slane %v447, 1
        %v567 = vsel %vm524, %v565, %v566
        %v568 = vrot.slane %v448, 1
        %v569 = vsel %vm524, %v566, %v568
        %v570 = vrot.slane %v449, 1
        %v571 = vrot.slane %v450, 1
        %v572 = vsel %vm524, %v570, %v571
        %v573 = vrot.slane %v451, 1
        %v574 = vsel %vm524, %v571, %v573
        %v575 = vrot.slane %v452, 1
        %v576 = vrot.slane %v453, 1
        %v577 = vsel %vm524, %v575, %v576
        %v578 = vrot.slane %v454, 1
        %v579 = vsel %vm524, %v576, %v578
        %v580 = vrot.slane %v455, 1
        %v581 = vrot.slane %v456, 1
        %v582 = vsel %vm524, %v580, %v581
        %v583 = vrot.slane %v457, 1
        %v584 = vsel %vm524, %v581, %v583
        %v585 = vrot.slane %v458, 1
        %v586 = vrot.slane %v459, 1
        %v587 = vsel %vm524, %v585, %v586
        %v588 = vrot.slane %v460, 1
        %v589 = vsel %vm524, %v586, %v588
        %v590 = vrot.slane %v461, 1
        %v591 = vrot.slane %v462, 1
        %v592 = vsel %vm524, %v590, %v591
        %v593 = vrot.slane %v463, 1
        %v594 = vsel %vm524, %v591, %v593
        %v595 = vrot.slane %v464, 1
        %v596 = vrot.slane %v465, 1
        %v597 = vsel %vm524, %v595, %v596
        %v598 = vrot.slane %v466, 1
        %v599 = vsel %vm524, %v596, %v598
        %v600 = vrot.slane %v467, 1
        %v601 = vrot.slane %v468, 1
        %v602 = vsel %vm524, %v600, %v601
        %v603 = vrot.slane %v469, 1
        %v604 = vsel %vm524, %v601, %v603
        %vm605 = vcmask 1045504
        %v606 = vrot.slane %v422, 2
        %v607 = vrot.slane %v423, 2
        %v608 = vsel %vm605, %v606, %v607
        %v609 = vrot.slane %v424, 2
        %v610 = vsel %vm605, %v607, %v609
        %v611 = vrot.slane %v425, 2
        %v612 = vrot.slane %v426, 2
        %v613 = vsel %vm605, %v611, %v612
        %v614 = vrot.slane %v427, 2
        %v615 = vsel %vm605, %v612, %v614
        %v616 = vrot.slane %v428, 2
        %v617 = vrot.slane %v429, 2
        %v618 = vsel %vm605, %v616, %v617
        %v619 = vrot.slane %v430, 2
        %v620 = vsel %vm605, %v617, %v619
        %v621 = vrot.slane %v431, 2
        %v622 = vrot.slane %v432, 2
        %v623 = vsel %vm605, %v621, %v622
        %v624 = vrot.slane %v433, 2
        %v625 = vsel %vm605, %v622, %v624
        %v626 = vrot.slane %v434, 2
        %v627 = vrot.slane %v435, 2
        %v628 = vsel %vm605, %v626, %v627
        %v629 = vrot.slane %v436, 2
        %v630 = vsel %vm605, %v627, %v629
        %v631 = vrot.slane %v437, 2
        %v632 = vrot.slane %v438, 2
        %v633 = vsel %vm605, %v631, %v632
        %v634 = vrot.slane %v439, 2
        %v635 = vsel %vm605, %v632, %v634
        %v636 = vrot.slane %v440, 2
        %v637 = vrot.slane %v441, 2
        %v638 = vsel %vm605, %v636, %v637
        %v639 = vrot.slane %v442, 2
        %v640 = vsel %vm605, %v637, %v639
        %v641 = vrot.slane %v443, 2
        %v642 = vrot.slane %v444, 2
        %v643 = vsel %vm605, %v641, %v642
        %v644 = vrot.slane %v445, 2
        %v645 = vsel %vm605, %v642, %v644
        %v646 = vrot.slane %v446, 2
        %v647 = vrot.slane %v447, 2
        %v648 = vsel %vm605, %v646, %v647
        %v649 = vrot.slane %v448, 2
        %v650 = vsel %vm605, %v647, %v649
        %v651 = vrot.slane %v449, 2
        %v652 = vrot.slane %v450, 2
        %v653 = vsel %vm605, %v651, %v652
        %v654 = vrot.slane %v451, 2
        %v655 = vsel %vm605, %v652, %v654
        %v656 = vrot.slane %v452, 2
        %v657 = vrot.slane %v453, 2
        %v658 = vsel %vm605, %v656, %v657
        %v659 = vrot.slane %v454, 2
        %v660 = vsel %vm605, %v657, %v659
        %v661 = vrot.slane %v455, 2
        %v662 = vrot.slane %v456, 2
        %v663 = vsel %vm605, %v661, %v662
        %v664 = vrot.slane %v457, 2
        %v665 = vsel %vm605, %v662, %v664
        %v666 = vrot.slane %v458, 2
        %v667 = vrot.slane %v459, 2
        %v668 = vsel %vm605, %v666, %v667
        %v669 = vrot.slane %v460, 2
        %v670 = vsel %vm605, %v667, %v669
        %v671 = vrot.slane %v461, 2
        %v672 = vrot.slane %v462, 2
        %v673 = vsel %vm605, %v671, %v672
        %v674 = vrot.slane %v463, 2
        %v675 = vsel %vm605, %v672, %v674
        %v676 = vrot.slane %v464, 2
        %v677 = vrot.slane %v465, 2
        %v678 = vsel %vm605, %v676, %v677
        %v679 = vrot.slane %v466, 2
        %v680 = vsel %vm605, %v677, %v679
        %v681 = vrot.slane %v467, 2
        %v682 = vrot.slane %v468, 2
        %v683 = vsel %vm605, %v681, %v682
        %v684 = vrot.slane %v469, 2
        %v685 = vsel %vm605, %v682, %v684
        %v689 = vrot.slane %v470, 1
        %v690 = vrot.slane %v471, 1
        %v691 = vsel %vm524, %v689, %v690
        %v692 = vrot.slane %v472, 1
        %v693 = vsel %vm524, %v690, %v692
        %v694 = vrot.slane %v470, 2
        %v695 = vrot.slane %v471, 2
        %v696 = vsel %vm605, %v694, %v695
        %v697 = vrot.slane %v472, 2
        %v698 = vsel %vm605, %v695, %v697
        %v702 = vrot.slane %v473, 1
        %v703 = vrot.slane %v474, 1
        %v704 = vsel %vm524, %v702, %v703
        %v705 = vrot.slane %v475, 1
        %v706 = vsel %vm524, %v703, %v705
        %v707 = vrot.slane %v473, 2
        %v708 = vrot.slane %v474, 2
        %v709 = vsel %vm605, %v707, %v708
        %v710 = vrot.slane %v475, 2
        %v711 = vsel %vm605, %v708, %v710
        %712 = vrot.lane.b32.xlu0 %v527, 4
        %v713 = vpop.permute.xlu0 %712
        %714 = vrot.lane.b32.xlu0 %v529, 4
        %v715 = vpop.permute.xlu0 %714
        %716 = vrot.lane.b32.xlu0 %v532, 4
        %v717 = vpop.permute.xlu0 %716
        %718 = vrot.lane.b32.xlu0 %v534, 4
        %v719 = vpop.permute.xlu0 %718
        %720 = vrot.lane.b32.xlu0 %v537, 4
        %v721 = vpop.permute.xlu0 %720
        %722 = vrot.lane.b32.xlu0 %v539, 4
        %v723 = vpop.permute.xlu0 %722
        %724 = vrot.lane.b32.xlu0 %v542, 4
        %v725 = vpop.permute.xlu0 %724
        %726 = vrot.lane.b32.xlu0 %v544, 4
        %v727 = vpop.permute.xlu0 %726
        %728 = vrot.lane.b32.xlu0 %v547, 4
        %v729 = vpop.permute.xlu0 %728
        %730 = vrot.lane.b32.xlu0 %v549, 4
        %v731 = vpop.permute.xlu0 %730
        %732 = vrot.lane.b32.xlu0 %v552, 4
        %v733 = vpop.permute.xlu0 %732
        %734 = vrot.lane.b32.xlu0 %v554, 4
        %v735 = vpop.permute.xlu0 %734
        %736 = vrot.lane.b32.xlu0 %v557, 4
        %v737 = vpop.permute.xlu0 %736
        %738 = vrot.lane.b32.xlu0 %v559, 4
        %v739 = vpop.permute.xlu0 %738
        %740 = vrot.lane.b32.xlu0 %v562, 4
        %v741 = vpop.permute.xlu0 %740
        %742 = vrot.lane.b32.xlu0 %v564, 4
        %v743 = vpop.permute.xlu0 %742
        %744 = vrot.lane.b32.xlu0 %v567, 4
        %v745 = vpop.permute.xlu0 %744
        %746 = vrot.lane.b32.xlu0 %v569, 4
        %v747 = vpop.permute.xlu0 %746
        %748 = vrot.lane.b32.xlu0 %v572, 4
        %v749 = vpop.permute.xlu0 %748
        %750 = vrot.lane.b32.xlu0 %v574, 4
        %v751 = vpop.permute.xlu0 %750
        %752 = vrot.lane.b32.xlu0 %v577, 4
        %v753 = vpop.permute.xlu0 %752
        %754 = vrot.lane.b32.xlu0 %v579, 4
        %v755 = vpop.permute.xlu0 %754
        %756 = vrot.lane.b32.xlu0 %v582, 4
        %v757 = vpop.permute.xlu0 %756
        %758 = vrot.lane.b32.xlu0 %v584, 4
        %v759 = vpop.permute.xlu0 %758
        %760 = vrot.lane.b32.xlu0 %v587, 4
        %v761 = vpop.permute.xlu0 %760
        %762 = vrot.lane.b32.xlu0 %v589, 4
        %v763 = vpop.permute.xlu0 %762
        %764 = vrot.lane.b32.xlu0 %v592, 4
        %v765 = vpop.permute.xlu0 %764
        %766 = vrot.lane.b32.xlu0 %v594, 4
        %v767 = vpop.permute.xlu0 %766
        %768 = vrot.lane.b32.xlu0 %v597, 4
        %v769 = vpop.permute.xlu0 %768
        %770 = vrot.lane.b32.xlu0 %v599, 4
        %v771 = vpop.permute.xlu0 %770
        %772 = vrot.lane.b32.xlu0 %v602, 4
        %v773 = vpop.permute.xlu0 %772
        %774 = vrot.lane.b32.xlu0 %v604, 4
        %v775 = vpop.permute.xlu0 %774
        %808 = vrot.lane.b32.xlu0 %v608, 8
        %v809 = vpop.permute.xlu0 %808
        %810 = vrot.lane.b32.xlu0 %v610, 8
        %v811 = vpop.permute.xlu0 %810
        %812 = vrot.lane.b32.xlu0 %v613, 8
        %v813 = vpop.permute.xlu0 %812
        %814 = vrot.lane.b32.xlu0 %v615, 8
        %v815 = vpop.permute.xlu0 %814
        %816 = vrot.lane.b32.xlu0 %v618, 8
        %v817 = vpop.permute.xlu0 %816
        %818 = vrot.lane.b32.xlu0 %v620, 8
        %v819 = vpop.permute.xlu0 %818
        %820 = vrot.lane.b32.xlu0 %v623, 8
        %v821 = vpop.permute.xlu0 %820
        %822 = vrot.lane.b32.xlu0 %v625, 8
        %v823 = vpop.permute.xlu0 %822
        %824 = vrot.lane.b32.xlu0 %v628, 8
        %v825 = vpop.permute.xlu0 %824
        %826 = vrot.lane.b32.xlu0 %v630, 8
        %v827 = vpop.permute.xlu0 %826
        %828 = vrot.lane.b32.xlu0 %v633, 8
        %v829 = vpop.permute.xlu0 %828
        %830 = vrot.lane.b32.xlu0 %v635, 8
        %v831 = vpop.permute.xlu0 %830
        %832 = vrot.lane.b32.xlu0 %v638, 8
        %v833 = vpop.permute.xlu0 %832
        %834 = vrot.lane.b32.xlu0 %v640, 8
        %v835 = vpop.permute.xlu0 %834
        %836 = vrot.lane.b32.xlu0 %v643, 8
        %v837 = vpop.permute.xlu0 %836
        %838 = vrot.lane.b32.xlu0 %v645, 8
        %v839 = vpop.permute.xlu0 %838
        %840 = vrot.lane.b32.xlu0 %v648, 8
        %v841 = vpop.permute.xlu0 %840
        %842 = vrot.lane.b32.xlu0 %v650, 8
        %v843 = vpop.permute.xlu0 %842
        %844 = vrot.lane.b32.xlu0 %v653, 8
        %v845 = vpop.permute.xlu0 %844
        %846 = vrot.lane.b32.xlu0 %v655, 8
        %v847 = vpop.permute.xlu0 %846
        %848 = vrot.lane.b32.xlu0 %v658, 8
        %v849 = vpop.permute.xlu0 %848
        %850 = vrot.lane.b32.xlu0 %v660, 8
        %v851 = vpop.permute.xlu0 %850
        %852 = vrot.lane.b32.xlu0 %v663, 8
        %v853 = vpop.permute.xlu0 %852
        %854 = vrot.lane.b32.xlu0 %v665, 8
        %v855 = vpop.permute.xlu0 %854
        %856 = vrot.lane.b32.xlu0 %v668, 8
        %v857 = vpop.permute.xlu0 %856
        %858 = vrot.lane.b32.xlu0 %v670, 8
        %v859 = vpop.permute.xlu0 %858
        %860 = vrot.lane.b32.xlu0 %v673, 8
        %v861 = vpop.permute.xlu0 %860
        %862 = vrot.lane.b32.xlu0 %v675, 8
        %v863 = vpop.permute.xlu0 %862
        %864 = vrot.lane.b32.xlu0 %v678, 8
        %v865 = vpop.permute.xlu0 %864
        %866 = vrot.lane.b32.xlu0 %v680, 8
        %v867 = vpop.permute.xlu0 %866
        %868 = vrot.lane.b32.xlu0 %v683, 8
        %v869 = vpop.permute.xlu0 %868
        %870 = vrot.lane.b32.xlu0 %v685, 8
        %v871 = vpop.permute.xlu0 %870
        %904 = vrot.lane.b32.xlu0 %v425, 12
        %v905 = vpop.permute.xlu0 %904
        %906 = vrot.lane.b32.xlu0 %v426, 12
        %v907 = vpop.permute.xlu0 %906
        %908 = vrot.lane.b32.xlu0 %v428, 12
        %v909 = vpop.permute.xlu0 %908
        %910 = vrot.lane.b32.xlu0 %v429, 12
        %v911 = vpop.permute.xlu0 %910
        %912 = vrot.lane.b32.xlu0 %v431, 12
        %v913 = vpop.permute.xlu0 %912
        %914 = vrot.lane.b32.xlu0 %v432, 12
        %v915 = vpop.permute.xlu0 %914
        %916 = vrot.lane.b32.xlu0 %v434, 12
        %v917 = vpop.permute.xlu0 %916
        %918 = vrot.lane.b32.xlu0 %v435, 12
        %v919 = vpop.permute.xlu0 %918
        %920 = vrot.lane.b32.xlu0 %v437, 12
        %v921 = vpop.permute.xlu0 %920
        %922 = vrot.lane.b32.xlu0 %v438, 12
        %v923 = vpop.permute.xlu0 %922
        %924 = vrot.lane.b32.xlu0 %v440, 12
        %v925 = vpop.permute.xlu0 %924
        %926 = vrot.lane.b32.xlu0 %v441, 12
        %v927 = vpop.permute.xlu0 %926
        %928 = vrot.lane.b32.xlu0 %v443, 12
        %v929 = vpop.permute.xlu0 %928
        %930 = vrot.lane.b32.xlu0 %v444, 12
        %v931 = vpop.permute.xlu0 %930
        %932 = vrot.lane.b32.xlu0 %v446, 12
        %v933 = vpop.permute.xlu0 %932
        %934 = vrot.lane.b32.xlu0 %v447, 12
        %v935 = vpop.permute.xlu0 %934
        %936 = vrot.lane.b32.xlu0 %v449, 12
        %v937 = vpop.permute.xlu0 %936
        %938 = vrot.lane.b32.xlu0 %v450, 12
        %v939 = vpop.permute.xlu0 %938
        %940 = vrot.lane.b32.xlu0 %v452, 12
        %v941 = vpop.permute.xlu0 %940
        %942 = vrot.lane.b32.xlu0 %v453, 12
        %v943 = vpop.permute.xlu0 %942
        %944 = vrot.lane.b32.xlu0 %v455, 12
        %v945 = vpop.permute.xlu0 %944
        %946 = vrot.lane.b32.xlu0 %v456, 12
        %v947 = vpop.permute.xlu0 %946
        %948 = vrot.lane.b32.xlu0 %v458, 12
        %v949 = vpop.permute.xlu0 %948
        %950 = vrot.lane.b32.xlu0 %v459, 12
        %v951 = vpop.permute.xlu0 %950
        %952 = vrot.lane.b32.xlu0 %v461, 12
        %v953 = vpop.permute.xlu0 %952
        %954 = vrot.lane.b32.xlu0 %v462, 12
        %v955 = vpop.permute.xlu0 %954
        %956 = vrot.lane.b32.xlu0 %v464, 12
        %v957 = vpop.permute.xlu0 %956
        %958 = vrot.lane.b32.xlu0 %v465, 12
        %v959 = vpop.permute.xlu0 %958
        %960 = vrot.lane.b32.xlu0 %v467, 12
        %v961 = vpop.permute.xlu0 %960
        %962 = vrot.lane.b32.xlu0 %v468, 12
        %v963 = vpop.permute.xlu0 %962
        %964 = vrot.lane.b32.xlu0 %v470, 12
        %v965 = vpop.permute.xlu0 %964
        %966 = vrot.lane.b32.xlu0 %v471, 12
        %v967 = vpop.permute.xlu0 %966
        %1000 = vrot.lane.b32.xlu0 %v532, 16
        %v1001 = vpop.permute.xlu0 %1000
        %1002 = vrot.lane.b32.xlu0 %v534, 16
        %v1003 = vpop.permute.xlu0 %1002
        %1004 = vrot.lane.b32.xlu0 %v537, 16
        %v1005 = vpop.permute.xlu0 %1004
        %1006 = vrot.lane.b32.xlu0 %v539, 16
        %v1007 = vpop.permute.xlu0 %1006
        %1008 = vrot.lane.b32.xlu0 %v542, 16
        %v1009 = vpop.permute.xlu0 %1008
        %1010 = vrot.lane.b32.xlu0 %v544, 16
        %v1011 = vpop.permute.xlu0 %1010
        %1012 = vrot.lane.b32.xlu0 %v547, 16
        %v1013 = vpop.permute.xlu0 %1012
        %1014 = vrot.lane.b32.xlu0 %v549, 16
        %v1015 = vpop.permute.xlu0 %1014
        %1016 = vrot.lane.b32.xlu0 %v552, 16
        %v1017 = vpop.permute.xlu0 %1016
        %1018 = vrot.lane.b32.xlu0 %v554, 16
        %v1019 = vpop.permute.xlu0 %1018
        %1020 = vrot.lane.b32.xlu0 %v557, 16
        %v1021 = vpop.permute.xlu0 %1020
        %1022 = vrot.lane.b32.xlu0 %v559, 16
        %v1023 = vpop.permute.xlu0 %1022
        %1024 = vrot.lane.b32.xlu0 %v562, 16
        %v1025 = vpop.permute.xlu0 %1024
        %1026 = vrot.lane.b32.xlu0 %v564, 16
        %v1027 = vpop.permute.xlu0 %1026
        %1028 = vrot.lane.b32.xlu0 %v567, 16
        %v1029 = vpop.permute.xlu0 %1028
        %1030 = vrot.lane.b32.xlu0 %v569, 16
        %v1031 = vpop.permute.xlu0 %1030
        %1032 = vrot.lane.b32.xlu0 %v572, 16
        %v1033 = vpop.permute.xlu0 %1032
        %1034 = vrot.lane.b32.xlu0 %v574, 16
        %v1035 = vpop.permute.xlu0 %1034
        %1036 = vrot.lane.b32.xlu0 %v577, 16
        %v1037 = vpop.permute.xlu0 %1036
        %1038 = vrot.lane.b32.xlu0 %v579, 16
        %v1039 = vpop.permute.xlu0 %1038
        %1040 = vrot.lane.b32.xlu0 %v582, 16
        %v1041 = vpop.permute.xlu0 %1040
        %1042 = vrot.lane.b32.xlu0 %v584, 16
        %v1043 = vpop.permute.xlu0 %1042
        %1044 = vrot.lane.b32.xlu0 %v587, 16
        %v1045 = vpop.permute.xlu0 %1044
        %1046 = vrot.lane.b32.xlu0 %v589, 16
        %v1047 = vpop.permute.xlu0 %1046
        %1048 = vrot.lane.b32.xlu0 %v592, 16
        %v1049 = vpop.permute.xlu0 %1048
        %1050 = vrot.lane.b32.xlu0 %v594, 16
        %v1051 = vpop.permute.xlu0 %1050
        %1052 = vrot.lane.b32.xlu0 %v597, 16
        %v1053 = vpop.permute.xlu0 %1052
        %1054 = vrot.lane.b32.xlu0 %v599, 16
        %v1055 = vpop.permute.xlu0 %1054
        %1056 = vrot.lane.b32.xlu0 %v602, 16
        %v1057 = vpop.permute.xlu0 %1056
        %1058 = vrot.lane.b32.xlu0 %v604, 16
        %v1059 = vpop.permute.xlu0 %1058
        %1060 = vrot.lane.b32.xlu0 %v691, 16
        %v1061 = vpop.permute.xlu0 %1060
        %1062 = vrot.lane.b32.xlu0 %v693, 16
        %v1063 = vpop.permute.xlu0 %1062
        %1096 = vrot.lane.b32.xlu0 %v613, 20
        %v1097 = vpop.permute.xlu0 %1096
        %1098 = vrot.lane.b32.xlu0 %v615, 20
        %v1099 = vpop.permute.xlu0 %1098
        %1100 = vrot.lane.b32.xlu0 %v618, 20
        %v1101 = vpop.permute.xlu0 %1100
        %1102 = vrot.lane.b32.xlu0 %v620, 20
        %v1103 = vpop.permute.xlu0 %1102
        %1104 = vrot.lane.b32.xlu0 %v623, 20
        %v1105 = vpop.permute.xlu0 %1104
        %1106 = vrot.lane.b32.xlu0 %v625, 20
        %v1107 = vpop.permute.xlu0 %1106
        %1108 = vrot.lane.b32.xlu0 %v628, 20
        %v1109 = vpop.permute.xlu0 %1108
        %1110 = vrot.lane.b32.xlu0 %v630, 20
        %v1111 = vpop.permute.xlu0 %1110
        %1112 = vrot.lane.b32.xlu0 %v633, 20
        %v1113 = vpop.permute.xlu0 %1112
        %1114 = vrot.lane.b32.xlu0 %v635, 20
        %v1115 = vpop.permute.xlu0 %1114
        %1116 = vrot.lane.b32.xlu0 %v638, 20
        %v1117 = vpop.permute.xlu0 %1116
        %1118 = vrot.lane.b32.xlu0 %v640, 20
        %v1119 = vpop.permute.xlu0 %1118
        %1120 = vrot.lane.b32.xlu0 %v643, 20
        %v1121 = vpop.permute.xlu0 %1120
        %1122 = vrot.lane.b32.xlu0 %v645, 20
        %v1123 = vpop.permute.xlu0 %1122
        %1124 = vrot.lane.b32.xlu0 %v648, 20
        %v1125 = vpop.permute.xlu0 %1124
        %1126 = vrot.lane.b32.xlu0 %v650, 20
        %v1127 = vpop.permute.xlu0 %1126
        %1128 = vrot.lane.b32.xlu0 %v653, 20
        %v1129 = vpop.permute.xlu0 %1128
        %1130 = vrot.lane.b32.xlu0 %v655, 20
        %v1131 = vpop.permute.xlu0 %1130
        %1132 = vrot.lane.b32.xlu0 %v658, 20
        %v1133 = vpop.permute.xlu0 %1132
        %1134 = vrot.lane.b32.xlu0 %v660, 20
        %v1135 = vpop.permute.xlu0 %1134
        %1136 = vrot.lane.b32.xlu0 %v663, 20
        %v1137 = vpop.permute.xlu0 %1136
        %1138 = vrot.lane.b32.xlu0 %v665, 20
        %v1139 = vpop.permute.xlu0 %1138
        %1140 = vrot.lane.b32.xlu0 %v668, 20
        %v1141 = vpop.permute.xlu0 %1140
        %1142 = vrot.lane.b32.xlu0 %v670, 20
        %v1143 = vpop.permute.xlu0 %1142
        %1144 = vrot.lane.b32.xlu0 %v673, 20
        %v1145 = vpop.permute.xlu0 %1144
        %1146 = vrot.lane.b32.xlu0 %v675, 20
        %v1147 = vpop.permute.xlu0 %1146
        %1148 = vrot.lane.b32.xlu0 %v678, 20
        %v1149 = vpop.permute.xlu0 %1148
        %1150 = vrot.lane.b32.xlu0 %v680, 20
        %v1151 = vpop.permute.xlu0 %1150
        %1152 = vrot.lane.b32.xlu0 %v683, 20
        %v1153 = vpop.permute.xlu0 %1152
        %1154 = vrot.lane.b32.xlu0 %v685, 20
        %v1155 = vpop.permute.xlu0 %1154
        %1156 = vrot.lane.b32.xlu0 %v696, 20
        %v1157 = vpop.permute.xlu0 %1156
        %1158 = vrot.lane.b32.xlu0 %v698, 20
        %v1159 = vpop.permute.xlu0 %1158
        %1192 = vrot.lane.b32.xlu0 %v428, 24
        %v1193 = vpop.permute.xlu0 %1192
        %1194 = vrot.lane.b32.xlu0 %v429, 24
        %v1195 = vpop.permute.xlu0 %1194
        %1196 = vrot.lane.b32.xlu0 %v431, 24
        %v1197 = vpop.permute.xlu0 %1196
        %1198 = vrot.lane.b32.xlu0 %v432, 24
        %v1199 = vpop.permute.xlu0 %1198
        %1200 = vrot.lane.b32.xlu0 %v434, 24
        %v1201 = vpop.permute.xlu0 %1200
        %1202 = vrot.lane.b32.xlu0 %v435, 24
        %v1203 = vpop.permute.xlu0 %1202
        %1204 = vrot.lane.b32.xlu0 %v437, 24
        %v1205 = vpop.permute.xlu0 %1204
        %1206 = vrot.lane.b32.xlu0 %v438, 24
        %v1207 = vpop.permute.xlu0 %1206
        %1208 = vrot.lane.b32.xlu0 %v440, 24
        %v1209 = vpop.permute.xlu0 %1208
        %1210 = vrot.lane.b32.xlu0 %v441, 24
        %v1211 = vpop.permute.xlu0 %1210
        %1212 = vrot.lane.b32.xlu0 %v443, 24
        %v1213 = vpop.permute.xlu0 %1212
        %1214 = vrot.lane.b32.xlu0 %v444, 24
        %v1215 = vpop.permute.xlu0 %1214
        %1216 = vrot.lane.b32.xlu0 %v446, 24
        %v1217 = vpop.permute.xlu0 %1216
        %1218 = vrot.lane.b32.xlu0 %v447, 24
        %v1219 = vpop.permute.xlu0 %1218
        %1220 = vrot.lane.b32.xlu0 %v449, 24
        %v1221 = vpop.permute.xlu0 %1220
        %1222 = vrot.lane.b32.xlu0 %v450, 24
        %v1223 = vpop.permute.xlu0 %1222
        %1224 = vrot.lane.b32.xlu0 %v452, 24
        %v1225 = vpop.permute.xlu0 %1224
        %1226 = vrot.lane.b32.xlu0 %v453, 24
        %v1227 = vpop.permute.xlu0 %1226
        %1228 = vrot.lane.b32.xlu0 %v455, 24
        %v1229 = vpop.permute.xlu0 %1228
        %1230 = vrot.lane.b32.xlu0 %v456, 24
        %v1231 = vpop.permute.xlu0 %1230
        %1232 = vrot.lane.b32.xlu0 %v458, 24
        %v1233 = vpop.permute.xlu0 %1232
        %1234 = vrot.lane.b32.xlu0 %v459, 24
        %v1235 = vpop.permute.xlu0 %1234
        %1236 = vrot.lane.b32.xlu0 %v461, 24
        %v1237 = vpop.permute.xlu0 %1236
        %1238 = vrot.lane.b32.xlu0 %v462, 24
        %v1239 = vpop.permute.xlu0 %1238
        %1240 = vrot.lane.b32.xlu0 %v464, 24
        %v1241 = vpop.permute.xlu0 %1240
        %1242 = vrot.lane.b32.xlu0 %v465, 24
        %v1243 = vpop.permute.xlu0 %1242
        %1244 = vrot.lane.b32.xlu0 %v467, 24
        %v1245 = vpop.permute.xlu0 %1244
        %1246 = vrot.lane.b32.xlu0 %v468, 24
        %v1247 = vpop.permute.xlu0 %1246
        %1248 = vrot.lane.b32.xlu0 %v470, 24
        %v1249 = vpop.permute.xlu0 %1248
        %1250 = vrot.lane.b32.xlu0 %v471, 24
        %v1251 = vpop.permute.xlu0 %1250
        %1252 = vrot.lane.b32.xlu0 %v473, 24
        %v1253 = vpop.permute.xlu0 %1252
        %1254 = vrot.lane.b32.xlu0 %v474, 24
        %v1255 = vpop.permute.xlu0 %1254
        %1288 = vrot.lane.b32.xlu0 %v537, 28
        %v1289 = vpop.permute.xlu0 %1288
        %1290 = vrot.lane.b32.xlu0 %v539, 28
        %v1291 = vpop.permute.xlu0 %1290
        %1292 = vrot.lane.b32.xlu0 %v542, 28
        %v1293 = vpop.permute.xlu0 %1292
        %1294 = vrot.lane.b32.xlu0 %v544, 28
        %v1295 = vpop.permute.xlu0 %1294
        %1296 = vrot.lane.b32.xlu0 %v547, 28
        %v1297 = vpop.permute.xlu0 %1296
        %1298 = vrot.lane.b32.xlu0 %v549, 28
        %v1299 = vpop.permute.xlu0 %1298
        %1300 = vrot.lane.b32.xlu0 %v552, 28
        %v1301 = vpop.permute.xlu0 %1300
        %1302 = vrot.lane.b32.xlu0 %v554, 28
        %v1303 = vpop.permute.xlu0 %1302
        %1304 = vrot.lane.b32.xlu0 %v557, 28
        %v1305 = vpop.permute.xlu0 %1304
        %1306 = vrot.lane.b32.xlu0 %v559, 28
        %v1307 = vpop.permute.xlu0 %1306
        %1308 = vrot.lane.b32.xlu0 %v562, 28
        %v1309 = vpop.permute.xlu0 %1308
        %1310 = vrot.lane.b32.xlu0 %v564, 28
        %v1311 = vpop.permute.xlu0 %1310
        %1312 = vrot.lane.b32.xlu0 %v567, 28
        %v1313 = vpop.permute.xlu0 %1312
        %1314 = vrot.lane.b32.xlu0 %v569, 28
        %v1315 = vpop.permute.xlu0 %1314
        %1316 = vrot.lane.b32.xlu0 %v572, 28
        %v1317 = vpop.permute.xlu0 %1316
        %1318 = vrot.lane.b32.xlu0 %v574, 28
        %v1319 = vpop.permute.xlu0 %1318
        %1320 = vrot.lane.b32.xlu0 %v577, 28
        %v1321 = vpop.permute.xlu0 %1320
        %1322 = vrot.lane.b32.xlu0 %v579, 28
        %v1323 = vpop.permute.xlu0 %1322
        %1324 = vrot.lane.b32.xlu0 %v582, 28
        %v1325 = vpop.permute.xlu0 %1324
        %1326 = vrot.lane.b32.xlu0 %v584, 28
        %v1327 = vpop.permute.xlu0 %1326
        %1328 = vrot.lane.b32.xlu0 %v587, 28
        %v1329 = vpop.permute.xlu0 %1328
        %1330 = vrot.lane.b32.xlu0 %v589, 28
        %v1331 = vpop.permute.xlu0 %1330
        %1332 = vrot.lane.b32.xlu0 %v592, 28
        %v1333 = vpop.permute.xlu0 %1332
        %1334 = vrot.lane.b32.xlu0 %v594, 28
        %v1335 = vpop.permute.xlu0 %1334
        %1336 = vrot.lane.b32.xlu0 %v597, 28
        %v1337 = vpop.permute.xlu0 %1336
        %1338 = vrot.lane.b32.xlu0 %v599, 28
        %v1339 = vpop.permute.xlu0 %1338
        %1340 = vrot.lane.b32.xlu0 %v602, 28
        %v1341 = vpop.permute.xlu0 %1340
        %1342 = vrot.lane.b32.xlu0 %v604, 28
        %v1343 = vpop.permute.xlu0 %1342
        %1344 = vrot.lane.b32.xlu0 %v691, 28
        %v1345 = vpop.permute.xlu0 %1344
        %1346 = vrot.lane.b32.xlu0 %v693, 28
        %v1347 = vpop.permute.xlu0 %1346
        %1348 = vrot.lane.b32.xlu0 %v704, 28
        %v1349 = vpop.permute.xlu0 %1348
        %1350 = vrot.lane.b32.xlu0 %v706, 28
        %v1351 = vpop.permute.xlu0 %1350
        %1384 = vrot.lane.b32.xlu0 %v618, 32
        %v1385 = vpop.permute.xlu0 %1384
        %1386 = vrot.lane.b32.xlu0 %v620, 32
        %v1387 = vpop.permute.xlu0 %1386
        %1388 = vrot.lane.b32.xlu0 %v623, 32
        %v1389 = vpop.permute.xlu0 %1388
        %1390 = vrot.lane.b32.xlu0 %v625, 32
        %v1391 = vpop.permute.xlu0 %1390
        %1392 = vrot.lane.b32.xlu0 %v628, 32
        %v1393 = vpop.permute.xlu0 %1392
        %1394 = vrot.lane.b32.xlu0 %v630, 32
        %v1395 = vpop.permute.xlu0 %1394
        %1396 = vrot.lane.b32.xlu0 %v633, 32
        %v1397 = vpop.permute.xlu0 %1396
        %1398 = vrot.lane.b32.xlu0 %v635, 32
        %v1399 = vpop.permute.xlu0 %1398
        %1400 = vrot.lane.b32.xlu0 %v638, 32
        %v1401 = vpop.permute.xlu0 %1400
        %1402 = vrot.lane.b32.xlu0 %v640, 32
        %v1403 = vpop.permute.xlu0 %1402
        %1404 = vrot.lane.b32.xlu0 %v643, 32
        %v1405 = vpop.permute.xlu0 %1404
        %1406 = vrot.lane.b32.xlu0 %v645, 32
        %v1407 = vpop.permute.xlu0 %1406
        %1408 = vrot.lane.b32.xlu0 %v648, 32
        %v1409 = vpop.permute.xlu0 %1408
        %1410 = vrot.lane.b32.xlu0 %v650, 32
        %v1411 = vpop.permute.xlu0 %1410
        %1412 = vrot.lane.b32.xlu0 %v653, 32
        %v1413 = vpop.permute.xlu0 %1412
        %1414 = vrot.lane.b32.xlu0 %v655, 32
        %v1415 = vpop.permute.xlu0 %1414
        %1416 = vrot.lane.b32.xlu0 %v658, 32
        %v1417 = vpop.permute.xlu0 %1416
        %1418 = vrot.lane.b32.xlu0 %v660, 32
        %v1419 = vpop.permute.xlu0 %1418
        %1420 = vrot.lane.b32.xlu0 %v663, 32
        %v1421 = vpop.permute.xlu0 %1420
        %1422 = vrot.lane.b32.xlu0 %v665, 32
        %v1423 = vpop.permute.xlu0 %1422
        %1424 = vrot.lane.b32.xlu0 %v668, 32
        %v1425 = vpop.permute.xlu0 %1424
        %1426 = vrot.lane.b32.xlu0 %v670, 32
        %v1427 = vpop.permute.xlu0 %1426
        %1428 = vrot.lane.b32.xlu0 %v673, 32
        %v1429 = vpop.permute.xlu0 %1428
        %1430 = vrot.lane.b32.xlu0 %v675, 32
        %v1431 = vpop.permute.xlu0 %1430
        %1432 = vrot.lane.b32.xlu0 %v678, 32
        %v1433 = vpop.permute.xlu0 %1432
        %1434 = vrot.lane.b32.xlu0 %v680, 32
        %v1435 = vpop.permute.xlu0 %1434
        %1436 = vrot.lane.b32.xlu0 %v683, 32
        %v1437 = vpop.permute.xlu0 %1436
        %1438 = vrot.lane.b32.xlu0 %v685, 32
        %v1439 = vpop.permute.xlu0 %1438
        %1440 = vrot.lane.b32.xlu0 %v696, 32
        %v1441 = vpop.permute.xlu0 %1440
        %1442 = vrot.lane.b32.xlu0 %v698, 32
        %v1443 = vpop.permute.xlu0 %1442
        %1444 = vrot.lane.b32.xlu0 %v709, 32
        %v1445 = vpop.permute.xlu0 %1444
        %1446 = vrot.lane.b32.xlu0 %v711, 32
        %v1447 = vpop.permute.xlu0 %1446
        %v1480 = vsel %vm333, %v422, %v713
        %v1481 = vsel %vm333, %v423, %v715
        %v1482 = vsel %vm333, %v425, %v717
        %v1483 = vsel %vm333, %v426, %v719
        %v1484 = vsel %vm333, %v428, %v721
        %v1485 = vsel %vm333, %v429, %v723
        %v1486 = vsel %vm333, %v431, %v725
        %v1487 = vsel %vm333, %v432, %v727
        %v1488 = vsel %vm333, %v434, %v729
        %v1489 = vsel %vm333, %v435, %v731
        %v1490 = vsel %vm333, %v437, %v733
        %v1491 = vsel %vm333, %v438, %v735
        %v1492 = vsel %vm333, %v440, %v737
        %v1493 = vsel %vm333, %v441, %v739
        %v1494 = vsel %vm333, %v443, %v741
        %v1495 = vsel %vm333, %v444, %v743
        %v1496 = vsel %vm333, %v446, %v745
        %v1497 = vsel %vm333, %v447, %v747
        %v1498 = vsel %vm333, %v449, %v749
        %v1499 = vsel %vm333, %v450, %v751
        %v1500 = vsel %vm333, %v452, %v753
        %v1501 = vsel %vm333, %v453, %v755
        %v1502 = vsel %vm333, %v455, %v757
        %v1503 = vsel %vm333, %v456, %v759
        %v1504 = vsel %vm333, %v458, %v761
        %v1505 = vsel %vm333, %v459, %v763
        %v1506 = vsel %vm333, %v461, %v765
        %v1507 = vsel %vm333, %v462, %v767
        %v1508 = vsel %vm333, %v464, %v769
        %v1509 = vsel %vm333, %v465, %v771
        %v1510 = vsel %vm333, %v467, %v773
        %v1511 = vsel %vm333, %v468, %v775
        %vm1512 = vcmask 64512
        %v1513 = vsel %vm1512, %v1480, %v809
        %v1514 = vsel %vm1512, %v1481, %v811
        %v1515 = vsel %vm1512, %v1482, %v813
        %v1516 = vsel %vm1512, %v1483, %v815
        %v1517 = vsel %vm1512, %v1484, %v817
        %v1518 = vsel %vm1512, %v1485, %v819
        %v1519 = vsel %vm1512, %v1486, %v821
        %v1520 = vsel %vm1512, %v1487, %v823
        %v1521 = vsel %vm1512, %v1488, %v825
        %v1522 = vsel %vm1512, %v1489, %v827
        %v1523 = vsel %vm1512, %v1490, %v829
        %v1524 = vsel %vm1512, %v1491, %v831
        %v1525 = vsel %vm1512, %v1492, %v833
        %v1526 = vsel %vm1512, %v1493, %v835
        %v1527 = vsel %vm1512, %v1494, %v837
        %v1528 = vsel %vm1512, %v1495, %v839
        %v1529 = vsel %vm1512, %v1496, %v841
        %v1530 = vsel %vm1512, %v1497, %v843
        %v1531 = vsel %vm1512, %v1498, %v845
        %v1532 = vsel %vm1512, %v1499, %v847
        %v1533 = vsel %vm1512, %v1500, %v849
        %v1534 = vsel %vm1512, %v1501, %v851
        %v1535 = vsel %vm1512, %v1502, %v853
        %v1536 = vsel %vm1512, %v1503, %v855
        %v1537 = vsel %vm1512, %v1504, %v857
        %v1538 = vsel %vm1512, %v1505, %v859
        %v1539 = vsel %vm1512, %v1506, %v861
        %v1540 = vsel %vm1512, %v1507, %v863
        %v1541 = vsel %vm1512, %v1508, %v865
        %v1542 = vsel %vm1512, %v1509, %v867
        %v1543 = vsel %vm1512, %v1510, %v869
        %v1544 = vsel %vm1512, %v1511, %v871
        %vm1545 = vcmask 97280
        %v1546 = vsel %vm1545, %v1513, %v905
        %v1547 = vsel %vm1545, %v1514, %v907
        %v1548 = vsel %vm1545, %v1515, %v909
        %v1549 = vsel %vm1545, %v1516, %v911
        %v1550 = vsel %vm1545, %v1517, %v913
        %v1551 = vsel %vm1545, %v1518, %v915
        %v1552 = vsel %vm1545, %v1519, %v917
        %v1553 = vsel %vm1545, %v1520, %v919
        %v1554 = vsel %vm1545, %v1521, %v921
        %v1555 = vsel %vm1545, %v1522, %v923
        %v1556 = vsel %vm1545, %v1523, %v925
        %v1557 = vsel %vm1545, %v1524, %v927
        %v1558 = vsel %vm1545, %v1525, %v929
        %v1559 = vsel %vm1545, %v1526, %v931
        %v1560 = vsel %vm1545, %v1527, %v933
        %v1561 = vsel %vm1545, %v1528, %v935
        %v1562 = vsel %vm1545, %v1529, %v937
        %v1563 = vsel %vm1545, %v1530, %v939
        %v1564 = vsel %vm1545, %v1531, %v941
        %v1565 = vsel %vm1545, %v1532, %v943
        %v1566 = vsel %vm1545, %v1533, %v945
        %v1567 = vsel %vm1545, %v1534, %v947
        %v1568 = vsel %vm1545, %v1535, %v949
        %v1569 = vsel %vm1545, %v1536, %v951
        %v1570 = vsel %vm1545, %v1537, %v953
        %v1571 = vsel %vm1545, %v1538, %v955
        %v1572 = vsel %vm1545, %v1539, %v957
        %v1573 = vsel %vm1545, %v1540, %v959
        %v1574 = vsel %vm1545, %v1541, %v961
        %v1575 = vsel %vm1545, %v1542, %v963
        %v1576 = vsel %vm1545, %v1543, %v965
        %v1577 = vsel %vm1545, %v1544, %v967
        %vm1578 = vcmask 130048
        %v1579 = vsel %vm1578, %v1546, %v1001
        %v1580 = vsel %vm1578, %v1547, %v1003
        %v1581 = vsel %vm1578, %v1548, %v1005
        %v1582 = vsel %vm1578, %v1549, %v1007
        %v1583 = vsel %vm1578, %v1550, %v1009
        %v1584 = vsel %vm1578, %v1551, %v1011
        %v1585 = vsel %vm1578, %v1552, %v1013
        %v1586 = vsel %vm1578, %v1553, %v1015
        %v1587 = vsel %vm1578, %v1554, %v1017
        %v1588 = vsel %vm1578, %v1555, %v1019
        %v1589 = vsel %vm1578, %v1556, %v1021
        %v1590 = vsel %vm1578, %v1557, %v1023
        %v1591 = vsel %vm1578, %v1558, %v1025
        %v1592 = vsel %vm1578, %v1559, %v1027
        %v1593 = vsel %vm1578, %v1560, %v1029
        %v1594 = vsel %vm1578, %v1561, %v1031
        %v1595 = vsel %vm1578, %v1562, %v1033
        %v1596 = vsel %vm1578, %v1563, %v1035
        %v1597 = vsel %vm1578, %v1564, %v1037
        %v1598 = vsel %vm1578, %v1565, %v1039
        %v1599 = vsel %vm1578, %v1566, %v1041
        %v1600 = vsel %vm1578, %v1567, %v1043
        %v1601 = vsel %vm1578, %v1568, %v1045
        %v1602 = vsel %vm1578, %v1569, %v1047
        %v1603 = vsel %vm1578, %v1570, %v1049
        %v1604 = vsel %vm1578, %v1571, %v1051
        %v1605 = vsel %vm1578, %v1572, %v1053
        %v1606 = vsel %vm1578, %v1573, %v1055
        %v1607 = vsel %vm1578, %v1574, %v1057
        %v1608 = vsel %vm1578, %v1575, %v1059
        %v1609 = vsel %vm1578, %v1576, %v1061
        %v1610 = vsel %vm1578, %v1577, %v1063
        %vm1611 = vcmask 162816
        %v1612 = vsel %vm1611, %v1579, %v1097
        %v1613 = vsel %vm1611, %v1580, %v1099
        %v1614 = vsel %vm1611, %v1581, %v1101
        %v1615 = vsel %vm1611, %v1582, %v1103
        %v1616 = vsel %vm1611, %v1583, %v1105
        %v1617 = vsel %vm1611, %v1584, %v1107
        %v1618 = vsel %vm1611, %v1585, %v1109
        %v1619 = vsel %vm1611, %v1586, %v1111
        %v1620 = vsel %vm1611, %v1587, %v1113
        %v1621 = vsel %vm1611, %v1588, %v1115
        %v1622 = vsel %vm1611, %v1589, %v1117
        %v1623 = vsel %vm1611, %v1590, %v1119
        %v1624 = vsel %vm1611, %v1591, %v1121
        %v1625 = vsel %vm1611, %v1592, %v1123
        %v1626 = vsel %vm1611, %v1593, %v1125
        %v1627 = vsel %vm1611, %v1594, %v1127
        %v1628 = vsel %vm1611, %v1595, %v1129
        %v1629 = vsel %vm1611, %v1596, %v1131
        %v1630 = vsel %vm1611, %v1597, %v1133
        %v1631 = vsel %vm1611, %v1598, %v1135
        %v1632 = vsel %vm1611, %v1599, %v1137
        %v1633 = vsel %vm1611, %v1600, %v1139
        %v1634 = vsel %vm1611, %v1601, %v1141
        %v1635 = vsel %vm1611, %v1602, %v1143
        %v1636 = vsel %vm1611, %v1603, %v1145
        %v1637 = vsel %vm1611, %v1604, %v1147
        %v1638 = vsel %vm1611, %v1605, %v1149
        %v1639 = vsel %vm1611, %v1606, %v1151
        %v1640 = vsel %vm1611, %v1607, %v1153
        %v1641 = vsel %vm1611, %v1608, %v1155
        %v1642 = vsel %vm1611, %v1609, %v1157
        %v1643 = vsel %vm1611, %v1610, %v1159
        %vm1644 = vcmask 195584
        %v1645 = vsel %vm1644, %v1612, %v1193
        %v1646 = vsel %vm1644, %v1613, %v1195
        %v1647 = vsel %vm1644, %v1614, %v1197
        %v1648 = vsel %vm1644, %v1615, %v1199
        %v1649 = vsel %vm1644, %v1616, %v1201
        %v1650 = vsel %vm1644, %v1617, %v1203
        %v1651 = vsel %vm1644, %v1618, %v1205
        %v1652 = vsel %vm1644, %v1619, %v1207
        %v1653 = vsel %vm1644, %v1620, %v1209
        %v1654 = vsel %vm1644, %v1621, %v1211
        %v1655 = vsel %vm1644, %v1622, %v1213
        %v1656 = vsel %vm1644, %v1623, %v1215
        %v1657 = vsel %vm1644, %v1624, %v1217
        %v1658 = vsel %vm1644, %v1625, %v1219
        %v1659 = vsel %vm1644, %v1626, %v1221
        %v1660 = vsel %vm1644, %v1627, %v1223
        %v1661 = vsel %vm1644, %v1628, %v1225
        %v1662 = vsel %vm1644, %v1629, %v1227
        %v1663 = vsel %vm1644, %v1630, %v1229
        %v1664 = vsel %vm1644, %v1631, %v1231
        %v1665 = vsel %vm1644, %v1632, %v1233
        %v1666 = vsel %vm1644, %v1633, %v1235
        %v1667 = vsel %vm1644, %v1634, %v1237
        %v1668 = vsel %vm1644, %v1635, %v1239
        %v1669 = vsel %vm1644, %v1636, %v1241
        %v1670 = vsel %vm1644, %v1637, %v1243
        %v1671 = vsel %vm1644, %v1638, %v1245
        %v1672 = vsel %vm1644, %v1639, %v1247
        %v1673 = vsel %vm1644, %v1640, %v1249
        %v1674 = vsel %vm1644, %v1641, %v1251
        %v1675 = vsel %vm1644, %v1642, %v1253
        %v1676 = vsel %vm1644, %v1643, %v1255
        %vm1677 = vcmask 228352
        %v1678 = vsel %vm1677, %v1645, %v1289
        %v1679 = vsel %vm1677, %v1646, %v1291
        %v1680 = vsel %vm1677, %v1647, %v1293
        %v1681 = vsel %vm1677, %v1648, %v1295
        %v1682 = vsel %vm1677, %v1649, %v1297
        %v1683 = vsel %vm1677, %v1650, %v1299
        %v1684 = vsel %vm1677, %v1651, %v1301
        %v1685 = vsel %vm1677, %v1652, %v1303
        %v1686 = vsel %vm1677, %v1653, %v1305
        %v1687 = vsel %vm1677, %v1654, %v1307
        %v1688 = vsel %vm1677, %v1655, %v1309
        %v1689 = vsel %vm1677, %v1656, %v1311
        %v1690 = vsel %vm1677, %v1657, %v1313
        %v1691 = vsel %vm1677, %v1658, %v1315
        %v1692 = vsel %vm1677, %v1659, %v1317
        %v1693 = vsel %vm1677, %v1660, %v1319
        %v1694 = vsel %vm1677, %v1661, %v1321
        %v1695 = vsel %vm1677, %v1662, %v1323
        %v1696 = vsel %vm1677, %v1663, %v1325
        %v1697 = vsel %vm1677, %v1664, %v1327
        %v1698 = vsel %vm1677, %v1665, %v1329
        %v1699 = vsel %vm1677, %v1666, %v1331
        %v1700 = vsel %vm1677, %v1667, %v1333
        %v1701 = vsel %vm1677, %v1668, %v1335
        %v1702 = vsel %vm1677, %v1669, %v1337
        %v1703 = vsel %vm1677, %v1670, %v1339
        %v1704 = vsel %vm1677, %v1671, %v1341
        %v1705 = vsel %vm1677, %v1672, %v1343
        %v1706 = vsel %vm1677, %v1673, %v1345
        %v1707 = vsel %vm1677, %v1674, %v1347
        %v1708 = vsel %vm1677, %v1675, %v1349
        %v1709 = vsel %vm1677, %v1676, %v1351
        %vm1710 = vcmask 261120
        %v1711 = vsel %vm1710, %v1678, %v1385
        %v1712 = vsel %vm1710, %v1679, %v1387
        %v1713 = vsel %vm1710, %v1680, %v1389
        %v1714 = vsel %vm1710, %v1681, %v1391
        %v1715 = vsel %vm1710, %v1682, %v1393
        %v1716 = vsel %vm1710, %v1683, %v1395
        %v1717 = vsel %vm1710, %v1684, %v1397
        %v1718 = vsel %vm1710, %v1685, %v1399
        %v1719 = vsel %vm1710, %v1686, %v1401
        %v1720 = vsel %vm1710, %v1687, %v1403
        %v1721 = vsel %vm1710, %v1688, %v1405
        %v1722 = vsel %vm1710, %v1689, %v1407
        %v1723 = vsel %vm1710, %v1690, %v1409
        %v1724 = vsel %vm1710, %v1691, %v1411
        %v1725 = vsel %vm1710, %v1692, %v1413
        %v1726 = vsel %vm1710, %v1693, %v1415
        %v1727 = vsel %vm1710, %v1694, %v1417
        %v1728 = vsel %vm1710, %v1695, %v1419
        %v1729 = vsel %vm1710, %v1696, %v1421
        %v1730 = vsel %vm1710, %v1697, %v1423
        %v1731 = vsel %vm1710, %v1698, %v1425
        %v1732 = vsel %vm1710, %v1699, %v1427
        %v1733 = vsel %vm1710, %v1700, %v1429
        %v1734 = vsel %vm1710, %v1701, %v1431
        %v1735 = vsel %vm1710, %v1702, %v1433
        %v1736 = vsel %vm1710, %v1703, %v1435
        %v1737 = vsel %vm1710, %v1704, %v1437
        %v1738 = vsel %vm1710, %v1705, %v1439
        %v1739 = vsel %vm1710, %v1706, %v1441
        %v1740 = vsel %vm1710, %v1707, %v1443
        %v1741 = vsel %vm1710, %v1708, %v1445
        %v1742 = vsel %vm1710, %v1709, %v1447
        %v1744 = vlaneseq
        %v1745 = vshrl.u32 %v1744, 7
        %v1746 = vsub.s32 0, %v1745
        %v1747 = vrot.slane %v332, %v1746
        %vm1749 = vcmask 293888
        %v1751 = vsel %vm1749, %v1711, 0
        %v1754 = vsel %vm1749, %v1712, 0
        %v1757 = vsel %vm1749, %v1713, 0
        %v1760 = vsel %vm1749, %v1714, 0
        %v1763 = vsel %vm1749, %v1715, 0
        %v1766 = vsel %vm1749, %v1716, 0
        %v1769 = vsel %vm1749, %v1717, 0
        %v1772 = vsel %vm1749, %v1718, 0
        %v1775 = vsel %vm1749, %v1719, 0
        %v1778 = vsel %vm1749, %v1720, 0
        %v1781 = vsel %vm1749, %v1721, 0
        %v1784 = vsel %vm1749, %v1722, 0
        %v1787 = vsel %vm1749, %v1723, 0
        %v1790 = vsel %vm1749, %v1724, 0
        %v1793 = vsel %vm1749, %v1725, 0
        %v1796 = vsel %vm1749, %v1726, 0
        %v1799 = vsel %vm1749, %v1727, 0
        %v1802 = vsel %vm1749, %v1728, 0
        %v1805 = vsel %vm1749, %v1729, 0
        %v1808 = vsel %vm1749, %v1730, 0
        %v1811 = vsel %vm1749, %v1731, 0
        %v1814 = vsel %vm1749, %v1732, 0
        %v1817 = vsel %vm1749, %v1733, 0
        %v1820 = vsel %vm1749, %v1734, 0
        %v1823 = vsel %vm1749, %v1735, 0
        %v1826 = vsel %vm1749, %v1736, 0
        %v1829 = vsel %vm1749, %v1737, 0
        %v1832 = vsel %vm1749, %v1738, 0
        %v1835 = vsel %vm1749, %v1739, 0
        %v1838 = vsel %vm1749, %v1740, 0
        %v1841 = vsel %vm1749, %v1741, 0
        %v1844 = vsel %vm1749, %v1742, 0
        %vm1846 = vcmask 1043456
        %v1848 = vsel %vm1846, %v331, 0
        %1850 = vmatprep.subr.mxu0 0.0
        %1851 = vmatpush1.msra.mxu0 %v327
        %1852 = vmatprep.subr.mxu0 0.0
        %1853 = vmatpush1.msra.mxu0 %v328
        %1854 = vmatprep.subr.mxu0 0.0
        %1855 = vmatpush1.msra.mxu0 %v329
        %1856 = vmatprep.subr.mxu0 0.0
        %1857 = vmatpush1.msra.mxu0 %v330
        %1858 = vmatprep.subr.mxu0 0.0
        %1859 = vmatpush1.msra.mxu0 %v1848
        %1860 = vmatprep.subr.mxu0 0.0
        %1861 = vmatpush1.msra.mxu0 0.0
        %1862 = vmatprep.subr.mxu0 0.0
        %1863 = vmatpush1.msra.mxu0 0.0
        %1864 = vmatprep.subr.mxu0 0.0
        %1865 = vmatpush1.msra.mxu0 0.0
        %1866 = vmatprep.subr.mxu0 0.0
        %1867 = vmatpush1.msra.mxu0 0.0
        %1868 = vmatprep.subr.mxu0 0.0
        %1869 = vmatpush1.msra.mxu0 0.0
        %1870 = vmatprep.subr.mxu0 0.0
        %1871 = vmatpush1.msra.mxu0 0.0
        %1872 = vmatprep.subr.mxu0 0.0
        %1873 = vmatpush1.msra.mxu0 0.0
        %1874 = vmatprep.subr.mxu0 0.0
        %1875 = vmatpush1.msra.mxu0 0.0
        %1876 = vmatprep.subr.mxu0 0.0
        %1877 = vmatpush1.msra.mxu0 0.0
        %1878 = vmatprep.subr.mxu0 0.0
        %1879 = vmatpush1.msra.mxu0 0.0
        %1880 = vmatprep.subr.mxu0 0.0
        %1881 = vmatpush1.msra.mxu0 0.0
        %1882 = vmatprep.subr.mxu0 0.0
        %1883 = vmatpush1.msra.mxu0 0.0
        %1884 = vmatprep.subr.mxu0 0.0
        %1885 = vmatpush1.msra.mxu0 0.0
        %1886 = vmatprep.subr.mxu0 0.0
        %1887 = vmatpush1.msra.mxu0 0.0
        %1888 = vmatprep.subr.mxu0 0.0
        %1889 = vmatpush1.msra.mxu0 0.0
        %1890 = vmatprep.subr.mxu0 0.0
        %1891 = vmatpush1.msra.mxu0 0.0
        %1892 = vmatprep.subr.mxu0 0.0
        %1893 = vmatpush1.msra.mxu0 0.0
        %1894 = vmatprep.subr.mxu0 0.0
        %1895 = vmatpush1.msra.mxu0 0.0
        %1896 = vmatprep.subr.mxu0 0.0
        %1897 = vmatpush1.msra.mxu0 0.0
        %1898 = vmatprep.subr.mxu0 0.0
        %1899 = vmatpush1.msra.mxu0 0.0
        %1900 = vmatprep.subr.mxu0 0.0
        %1901 = vmatpush1.msra.mxu0 0.0
        %1902 = vmatprep.subr.mxu0 0.0
        %1903 = vmatpush1.msra.mxu0 0.0
        %1904 = vmatprep.subr.mxu0 0.0
        %1905 = vmatpush1.msra.mxu0 0.0
        %1906 = vmatprep.subr.mxu0 0.0
        %1907 = vmatpush1.msra.mxu0 0.0
        %1908 = vmatprep.subr.mxu0 0.0
        %1909 = vmatpush1.msra.mxu0 0.0
        %1910 = vmatprep.subr.mxu0 0.0
        %1911 = vmatpush1.msra.mxu0 0.0
        %1912 = vmatprep.subr.mxu0 0.0
        %1913 = vmatpush1.msra.mxu0 0.0
        %1914 = vmatprep.mubr.f32.mxu0 0.0
        %1915 = vmatmul.mubr.f32.gmra.mrb[0].mxu0 %v1751
        %v1916 = vpop.f32.mrb[0].mxu0
        %v1917 = vadd.f32 %v1747, %v1916
        %v1918 = vpop.f32.mrb[0].mxu0
        %1919 = vmatprep.mubr.f32.mxu0 0.0
        %1920 = vmatmul.mubr.f32.gmra.mrb[0].mxu0 %v1754
        %v1921 = vpop.f32.mrb[0].mxu0
        %v1922 = vadd.f32 %v1747, %v1921
        %v1923 = vpop.f32.mrb[0].mxu0
        %1924 = vmatprep.mubr.f32.mxu0 0.0
        %1925 = vmatmul.mubr.f32.gmra.mrb[0].mxu0 %v1757
        %v1926 = vpop.f32.mrb[0].mxu0
        %v1927 = vadd.f32 %v1747, %v1926
        %v1928 = vpop.f32.mrb[0].mxu0
        %1929 = vmatprep.mubr.f32.mxu0 0.0
        %1930 = vmatmul.mubr.f32.gmra.mrb[0].mxu0 %v1760
        %v1931 = vpop.f32.mrb[0].mxu0
        %v1932 = vadd.f32 %v1747, %v1931
        %v1933 = vpop.f32.mrb[0].mxu0
        %1934 = vmatprep.mubr.f32.mxu0 0.0
        %1935 = vmatmul.mubr.f32.gmra.mrb[0].mxu0 %v1763
        %v1936 = vpop.f32.mrb[0].mxu0
        %v1937 = vadd.f32 %v1747, %v1936
        %v1938 = vpop.f32.mrb[0].mxu0
        %1939 = vmatprep.mubr.f32.mxu0 0.0
        %1940 = vmatmul.mubr.f32.gmra.mrb[0].mxu0 %v1766
        %v1941 = vpop.f32.mrb[0].mxu0
        %v1942 = vadd.f32 %v1747, %v1941
        %v1943 = vpop.f32.mrb[0].mxu0
        %1944 = vmatprep.mubr.f32.mxu0 0.0
        %1945 = vmatmul.mubr.f32.gmra.mrb[0].mxu0 %v1769
        %v1946 = vpop.f32.mrb[0].mxu0
        %v1947 = vadd.f32 %v1747, %v1946
        %v1948 = vpop.f32.mrb[0].mxu0
        %1949 = vmatprep.mubr.f32.mxu0 0.0
        %1950 = vmatmul.mubr.f32.gmra.mrb[0].mxu0 %v1772
        %v1951 = vpop.f32.mrb[0].mxu0
        %v1952 = vadd.f32 %v1747, %v1951
        %v1953 = vpop.f32.mrb[0].mxu0
        %1954 = vmatprep.mubr.f32.mxu0 0.0
        %1955 = vmatmul.mubr.f32.gmra.mrb[0].mxu0 %v1775
        %v1956 = vpop.f32.mrb[0].mxu0
        %v1957 = vadd.f32 %v1747, %v1956
        %v1958 = vpop.f32.mrb[0].mxu0
        %1959 = vmatprep.mubr.f32.mxu0 0.0
        %1960 = vmatmul.mubr.f32.gmra.mrb[0].mxu0 %v1778
        %v1961 = vpop.f32.mrb[0].mxu0
        %v1962 = vadd.f32 %v1747, %v1961
        %v1963 = vpop.f32.mrb[0].mxu0
        %1964 = vmatprep.mubr.f32.mxu0 0.0
        %1965 = vmatmul.mubr.f32.gmra.mrb[0].mxu0 %v1781
        %v1966 = vpop.f32.mrb[0].mxu0
        %v1967 = vadd.f32 %v1747, %v1966
        %v1968 = vpop.f32.mrb[0].mxu0
        %1969 = vmatprep.mubr.f32.mxu0 0.0
        %1970 = vmatmul.mubr.f32.gmra.mrb[0].mxu0 %v1784
        %v1971 = vpop.f32.mrb[0].mxu0
        %v1972 = vadd.f32 %v1747, %v1971
        %v1973 = vpop.f32.mrb[0].mxu0
        %1974 = vmatprep.mubr.f32.mxu0 0.0
        %1975 = vmatmul.mubr.f32.gmra.mrb[0].mxu0 %v1787
        %v1976 = vpop.f32.mrb[0].mxu0
        %v1977 = vadd.f32 %v1747, %v1976
        %v1978 = vpop.f32.mrb[0].mxu0
        %1979 = vmatprep.mubr.f32.mxu0 0.0
        %1980 = vmatmul.mubr.f32.gmra.mrb[0].mxu0 %v1790
        %v1981 = vpop.f32.mrb[0].mxu0
        %v1982 = vadd.f32 %v1747, %v1981
        %v1983 = vpop.f32.mrb[0].mxu0
        %1984 = vmatprep.mubr.f32.mxu0 0.0
        %1985 = vmatmul.mubr.f32.gmra.mrb[0].mxu0 %v1793
        %v1986 = vpop.f32.mrb[0].mxu0
        %v1987 = vadd.f32 %v1747, %v1986
        %v1988 = vpop.f32.mrb[0].mxu0
        %1989 = vmatprep.mubr.f32.mxu0 0.0
        %1990 = vmatmul.mubr.f32.gmra.mrb[0].mxu0 %v1796
        %v1991 = vpop.f32.mrb[0].mxu0
        %v1992 = vadd.f32 %v1747, %v1991
        %v1993 = vpop.f32.mrb[0].mxu0
        %1994 = vmatprep.mubr.f32.mxu0 0.0
        %1995 = vmatmul.mubr.f32.gmra.mrb[0].mxu0 %v1799
        %v1996 = vpop.f32.mrb[0].mxu0
        %v1997 = vadd.f32 %v1747, %v1996
        %v1998 = vpop.f32.mrb[0].mxu0
        %1999 = vmatprep.mubr.f32.mxu0 0.0
        %2000 = vmatmul.mubr.f32.gmra.mrb[0].mxu0 %v1802
        %v2001 = vpop.f32.mrb[0].mxu0
        %v2002 = vadd.f32 %v1747, %v2001
        %v2003 = vpop.f32.mrb[0].mxu0
        %2004 = vmatprep.mubr.f32.mxu0 0.0
        %2005 = vmatmul.mubr.f32.gmra.mrb[0].mxu0 %v1805
        %v2006 = vpop.f32.mrb[0].mxu0
        %v2007 = vadd.f32 %v1747, %v2006
        %v2008 = vpop.f32.mrb[0].mxu0
        %2009 = vmatprep.mubr.f32.mxu0 0.0
        %2010 = vmatmul.mubr.f32.gmra.mrb[0].mxu0 %v1808
        %v2011 = vpop.f32.mrb[0].mxu0
        %v2012 = vadd.f32 %v1747, %v2011
        %v2013 = vpop.f32.mrb[0].mxu0
        %2014 = vmatprep.mubr.f32.mxu0 0.0
        %2015 = vmatmul.mubr.f32.gmra.mrb[0].mxu0 %v1811
        %v2016 = vpop.f32.mrb[0].mxu0
        %v2017 = vadd.f32 %v1747, %v2016
        %v2018 = vpop.f32.mrb[0].mxu0
        %2019 = vmatprep.mubr.f32.mxu0 0.0
        %2020 = vmatmul.mubr.f32.gmra.mrb[0].mxu0 %v1814
        %v2021 = vpop.f32.mrb[0].mxu0
        %v2022 = vadd.f32 %v1747, %v2021
        %v2023 = vpop.f32.mrb[0].mxu0
        %2024 = vmatprep.mubr.f32.mxu0 0.0
        %2025 = vmatmul.mubr.f32.gmra.mrb[0].mxu0 %v1817
        %v2026 = vpop.f32.mrb[0].mxu0
        %v2027 = vadd.f32 %v1747, %v2026
        %v2028 = vpop.f32.mrb[0].mxu0
        %2029 = vmatprep.mubr.f32.mxu0 0.0
        %2030 = vmatmul.mubr.f32.gmra.mrb[0].mxu0 %v1820
        %v2031 = vpop.f32.mrb[0].mxu0
        %v2032 = vadd.f32 %v1747, %v2031
        %v2033 = vpop.f32.mrb[0].mxu0
        %2034 = vmatprep.mubr.f32.mxu0 0.0
        %2035 = vmatmul.mubr.f32.gmra.mrb[0].mxu0 %v1823
        %v2036 = vpop.f32.mrb[0].mxu0
        %v2037 = vadd.f32 %v1747, %v2036
        %v2038 = vpop.f32.mrb[0].mxu0
        %2039 = vmatprep.mubr.f32.mxu0 0.0
        %2040 = vmatmul.mubr.f32.gmra.mrb[0].mxu0 %v1826
        %v2041 = vpop.f32.mrb[0].mxu0
        %v2042 = vadd.f32 %v1747, %v2041
        %v2043 = vpop.f32.mrb[0].mxu0
        %2044 = vmatprep.mubr.f32.mxu0 0.0
        %2045 = vmatmul.mubr.f32.gmra.mrb[0].mxu0 %v1829
        %v2046 = vpop.f32.mrb[0].mxu0
        %v2047 = vadd.f32 %v1747, %v2046
        %v2048 = vpop.f32.mrb[0].mxu0
        %2049 = vmatprep.mubr.f32.mxu0 0.0
        %2050 = vmatmul.mubr.f32.gmra.mrb[0].mxu0 %v1832
        %v2051 = vpop.f32.mrb[0].mxu0
        %v2052 = vadd.f32 %v1747, %v2051
        %v2053 = vpop.f32.mrb[0].mxu0
        %2054 = vmatprep.mubr.f32.mxu0 0.0
        %2055 = vmatmul.mubr.f32.gmra.mrb[0].mxu0 %v1835
        %v2056 = vpop.f32.mrb[0].mxu0
        %v2057 = vadd.f32 %v1747, %v2056
        %v2058 = vpop.f32.mrb[0].mxu0
        %2059 = vmatprep.mubr.f32.mxu0 0.0
        %2060 = vmatmul.mubr.f32.gmra.mrb[0].mxu0 %v1838
        %v2061 = vpop.f32.mrb[0].mxu0
        %v2062 = vadd.f32 %v1747, %v2061
        %v2063 = vpop.f32.mrb[0].mxu0
        %2064 = vmatprep.mubr.f32.mxu0 0.0
        %2065 = vmatmul.mubr.f32.gmra.mrb[0].mxu0 %v1841
        %v2066 = vpop.f32.mrb[0].mxu0
        %v2067 = vadd.f32 %v1747, %v2066
        %v2068 = vpop.f32.mrb[0].mxu0
        %2069 = vmatprep.mubr.f32.mxu0 0.0
        %2070 = vmatmul.mubr.f32.gmra.mrb[0].mxu0 %v1844
        %v2071 = vpop.f32.mrb[0].mxu0
        %v2072 = vadd.f32 %v1747, %v2071
        %v2073 = vpop.f32.mrb[0].mxu0
        %2074 = vdwg.mxu0
        %2075 = vst.msk [vmem:[%s294] sm:$0xff] %vm1710, %v1917
        %2076 = vst.msk [vmem:[%s294 + $0x8] sm:$0xff] %vm1710, %v1922
        %2077 = vst.msk [vmem:[%s294 + $0x10] sm:$0xff] %vm1710, %v1927
        %2078 = vst.msk [vmem:[%s294 + $0x18] sm:$0xff] %vm1710, %v1932
        %2079 = vst.msk [vmem:[%s294 + $0x20] sm:$0xff] %vm1710, %v1937
        %2080 = vst.msk [vmem:[%s294 + $0x28] sm:$0xff] %vm1710, %v1942
        %2081 = vst.msk [vmem:[%s294 + $0x30] sm:$0xff] %vm1710, %v1947
        %2082 = vst.msk [vmem:[%s294 + $0x38] sm:$0xff] %vm1710, %v1952
        %2083 = vst.msk [vmem:[%s294 + $0x40] sm:$0xff] %vm1710, %v1957
        %2084 = vst.msk [vmem:[%s294 + $0x48] sm:$0xff] %vm1710, %v1962
        %2085 = vst.msk [vmem:[%s294 + $0x50] sm:$0xff] %vm1710, %v1967
        %2086 = vst.msk [vmem:[%s294 + $0x58] sm:$0xff] %vm1710, %v1972
        %2087 = vst.msk [vmem:[%s294 + $0x60] sm:$0xff] %vm1710, %v1977
        %2088 = vst.msk [vmem:[%s294 + $0x68] sm:$0xff] %vm1710, %v1982
        %2089 = vst.msk [vmem:[%s294 + $0x70] sm:$0xff] %vm1710, %v1987
        %2090 = vst.msk [vmem:[%s294 + $0x78] sm:$0xff] %vm1710, %v1992
        %2091 = vst.msk [vmem:[%s294 + $0x80] sm:$0xff] %vm1710, %v1997
        %2092 = vst.msk [vmem:[%s294 + $0x88] sm:$0xff] %vm1710, %v2002
        %2093 = vst.msk [vmem:[%s294 + $0x90] sm:$0xff] %vm1710, %v2007
        %2094 = vst.msk [vmem:[%s294 + $0x98] sm:$0xff] %vm1710, %v2012
        %2095 = vst.msk [vmem:[%s294 + $0xa0] sm:$0xff] %vm1710, %v2017
        %2096 = vst.msk [vmem:[%s294 + $0xa8] sm:$0xff] %vm1710, %v2022
        %2097 = vst.msk [vmem:[%s294 + $0xb0] sm:$0xff] %vm1710, %v2027
        %2098 = vst.msk [vmem:[%s294 + $0xb8] sm:$0xff] %vm1710, %v2032
        %2099 = vst.msk [vmem:[%s294 + $0xc0] sm:$0xff] %vm1710, %v2037
        %2100 = vst.msk [vmem:[%s294 + $0xc8] sm:$0xff] %vm1710, %v2042
        %2101 = vst.msk [vmem:[%s294 + $0xd0] sm:$0xff] %vm1710, %v2047
        %2102 = vst.msk [vmem:[%s294 + $0xd8] sm:$0xff] %vm1710, %v2052
        %2103 = vst.msk [vmem:[%s294 + $0xe0] sm:$0xff] %vm1710, %v2057
        %2104 = vst.msk [vmem:[%s294 + $0xe8] sm:$0xff] %vm1710, %v2062
        %2105 = vst.msk [vmem:[%s294 + $0xf0] sm:$0xff] %vm1710, %v2067
        %2106 = vst.msk [vmem:[%s294 + $0xf8] sm:$0xff] %vm1710, %v2072
        %s2107 = sand.u32 %s142, 1
        %s2108 = scalar_lea.sflag [#allocation5], %s2107
        %s2109 = sand.u32 %s142, 1
        %s2110 = smul.addr %s2109, 256
        %s2111 = scalar_lea.vmem [#allocation12], %s2110
        // Predicated region
        $region61: #{tpu_custom_call.1} parent=39 // pred_check
          %p2112 = pneg %p152
        $region62: #{tpu_custom_call.1} parent=39 // pred_check_branch
          %2114 = sbr.rel (%p2112) target = $region64
        $region63: #{tpu_custom_call.1} parent=39 // pred_region
          %s2116 = ssub.s32 4096, 4096
          %2117 = vsyncadd %s2108, %s2116
          %s2118 = smul.addr %s24, 32
          %s2119 = smul.addr %s2118, 128
          %s2120 = scalar_lea.hbm %s5, %s2119
          %s2121 = sshll.u32 %s2111, 4
          %s2122 = int_to_ptr.vmem [resolvable:$true] %s2121
          %2127 = dma.vmem_to_hbm [thread:$0]  %s2122, 4096, %s2120, %s2108, 128, 128, 8
        $region64: #{tpu_custom_call.1} parent=39 // pred_fallthru
          _
      $region40: #{tpu_custom_call.1} parent=5 // pred_fallthru
        _
      %p2128 = scmp.le.s32.totalorder 2, %s19
      // Predicated region
      $region65: #{tpu_custom_call.1} parent=5 // pred_check
        %p2129 = pneg %p2128
      $region66: #{tpu_custom_call.1} parent=5 // pred_check_branch
        %2131 = sbr.rel (%p2129) target = $region68
      $region67: #{tpu_custom_call.1} parent=5 // pred_region
        %s2132 = ssub.s32 %s19, 2
        // Predicated region
        $region69: #{tpu_custom_call.1} parent=67 // pred_check
          %p2133 = pneg %p158
        $region70: #{tpu_custom_call.1} parent=67 // pred_check_branch
          %2135 = sbr.rel (%p2133) target = $region72
        $region71: #{tpu_custom_call.1} parent=67 // pred_region
          %s2136 = sand.u32 %s143, 1
          %s2137 = scalar_lea.sflag [#allocation5], %s2136
          %s2138 = sand.u32 %s143, 1
          %s2139 = smul.addr %s2138, 256
          %s2140 = scalar_lea.vmem [#allocation12], %s2139
          %2141 = dma.done %s2137, 4096
        $region72: #{tpu_custom_call.1} parent=67 // pred_fallthru
          _
      $region68: #{tpu_custom_call.1} parent=5 // pred_fallthru
        _
    $region6: #{tpu_custom_call.1} parent=1 // loop_footer
      %s23 = sadd.s32 1, %s19
    $region7: #{tpu_custom_call.1} parent=1 // loop_footer_branch
      %18 = sbr.rel target = $region3
    $region8: #{tpu_custom_call.1} parent=1 // loop_exit
      _
    %2142 = vsyncpa [#allocation4], 1
    %s2143 = scalar_lea.sflag [#allocation4], 1
    %2144 = vsyncpa %s2143, 1
    %2145 = vsyncpa [#allocation7], 1
    %2146 = vsyncpa [#allocation10], 1
    %2147 = vsyncpa [#allocation5], 1
    %s2148 = scalar_lea.sflag [#allocation5], 1
    %2149 = vsyncpa %s2148, 1

</llo_original>
